<compile_context>
chip_gen: v7x
topology: tpu7x:2x2x1
jax: 0.10.0
libtpu: 0.0.40
codegen_flags: <defaults>
</compile_context>

<pallas_src>
import math
import functools

import jax
import jax.numpy as jnp
from jax.experimental import pallas as pl
from jax.experimental.pallas import tpu as pltpu


def _round_up(n, m):
    return ((n + m - 1) // m) * m


def _pad_axis(x, target, axis):
    pad = target - x.shape[axis]
    if pad == 0:
        return x
    cfg = [(0, 0)] * x.ndim
    cfg[axis] = (0, pad)
    return jnp.pad(x, cfg)


def _pad_last(x, target):
    return _pad_axis(x, target, x.ndim - 1)


# --------------------------------------------------------------------------
# Pallas kernel: the whole encoder stack, grid over layers, activation resident
# in VMEM scratch, per-layer weights streamed via BlockSpec index_map.
# --------------------------------------------------------------------------
def _stacked_encoder_kernel(x_ref,
                            wqkv_ref, bqkv_ref, wo_ref, bo_ref,
                            g1_ref, be1_ref,
                            w1_ref, b1_ref, w2_ref, b2_ref,
                            g2_ref, be2_ref,
                            o_ref, act_ref,
                            *, batch, seq, num_heads, head_size, d_model,
                            compute_dtype):
    layer = pl.program_id(0)

    @pl.when(layer == 0)
    def _():
        act_ref[...] = x_ref[...]            # load the embedded+PE activation once

    x = act_ref[...]                         # (B*S, Dp) float32, VMEM-resident
    n_rows, d_pad = x.shape
    hd = num_heads * head_size
    eps = 1e-5

    # Mask selecting the real (unpadded) feature columns for LayerNorm stats.
    col = jax.lax.broadcasted_iota(jnp.int32, (1, d_pad), 1)
    feat_mask = (col < d_model).astype(jnp.float32)
    inv_d = 1.0 / float(d_model)

    def layer_norm(z, g, b):
        z = z * feat_mask
        mu = jnp.sum(z, axis=-1, keepdims=True) * inv_d
        zc = (z - mu) * feat_mask
        var = jnp.sum(zc * zc, axis=-1, keepdims=True) * inv_d
        return zc * jax.lax.rsqrt(var + eps) * g + b

    # ---- fused Q/K/V projection: one MXU matmul over all B*S rows ----------
    qkv = jnp.dot(x.astype(compute_dtype), wqkv_ref[0],
                  preferred_element_type=jnp.float32) + bqkv_ref[0]   # (B*S, 3*hd)

    q = qkv[:, 0 * hd:1 * hd].reshape(batch, seq, hd)
    k = qkv[:, 1 * hd:2 * hd].reshape(batch, seq, hd)
    v = qkv[:, 2 * hd:3 * hd].reshape(batch, seq, hd)

    wo = wo_ref[0]                          # (hd, Dp), padded cols are zero
    scale = 1.0 / math.sqrt(head_size)

    # ---- multi-head self attention, batched over the batch dim -------------
    ctx = jnp.zeros((n_rows, d_pad), jnp.float32)
    for h in range(num_heads):               # static unroll
        sl = slice(h * head_size, (h + 1) * head_size)
        qh = q[..., sl].astype(compute_dtype)          # (B, S, hs)
        kh = k[..., sl].astype(compute_dtype)
        vh = v[..., sl].astype(compute_dtype)
        # scores via last-dim contraction (no explicit K transpose)
        s = jnp.einsum('bqd,bkd->bqk', qh, kh,
                       preferred_element_type=jnp.float32) * scale    # (B, S, S)
        s = s - jnp.max(s, axis=-1, keepdims=True)
        p = jnp.exp(s)
        lsum = jnp.sum(p, axis=-1, keepdims=True)
        pv = jnp.einsum('bqk,bkd->bqd', p.astype(compute_dtype), vh,
                        preferred_element_type=jnp.float32)           # (B, S, hs)
        # normalise after P@V: small broadcast mul, reciprocal on the EUP
        pv = pv * pl.reciprocal(lsum, approx=True)
        # per-head output projection, accumulated (replaces head concatenate)
        ctx = ctx + jnp.dot(pv.reshape(n_rows, head_size).astype(compute_dtype),
                            wo[sl, :], preferred_element_type=jnp.float32)
    attn = ctx + bo_ref[0]

    # residual + LayerNorm 1 (requires in_size == out_size, asserted in wrapper)
    h1 = layer_norm(x + attn, g1_ref[0], be1_ref[0])

    # ---- position-wise feed-forward -----------------------------------------
    f = jnp.dot(h1.astype(compute_dtype), w1_ref[0],
                preferred_element_type=jnp.float32) + b1_ref[0]
    f = jnp.maximum(f, 0.0)
    f = jnp.dot(f.astype(compute_dtype), w2_ref[0],
                preferred_element_type=jnp.float32) + b2_ref[0]

    # residual + LayerNorm 2
    h2 = layer_norm(h1 + f, g2_ref[0], be2_ref[0])

    act_ref[...] = h2                        # carry to the next layer (VMEM)
    o_ref[...] = h2                          # lane-dense (B*S, Dp) output slab


# --------------------------------------------------------------------------
# Host-side weight prep: stack layers, fuse QKV, pad to lane-dense dims, bf16.
# --------------------------------------------------------------------------
def _stack_layer_params(blocks, d_pad, f_pad, compute_dtype):
    def stack(name):
        return jnp.stack([blk[name] for blk in blocks], axis=0)

    wqkv = jnp.concatenate([stack("wq"), stack("wk"), stack("wv")], axis=-1)
    bqkv = jnp.concatenate([stack("bq"), stack("bk"), stack("bv")], axis=-1)
    return dict(
        wqkv=_pad_axis(wqkv, d_pad, 1).astype(compute_dtype),      # (L, Dp, 3*hd)
        bqkv=bqkv.astype(jnp.float32),                             # (L, 1, 3*hd)
        wo=_pad_last(stack("wo"), d_pad).astype(compute_dtype),    # (L, hd, Dp)
        bo=_pad_last(stack("bo"), d_pad).astype(jnp.float32),
        g1=_pad_last(stack("ln1_g"), d_pad).astype(jnp.float32),
        be1=_pad_last(stack("ln1_b"), d_pad).astype(jnp.float32),
        w1=_pad_last(_pad_axis(stack("w1"), d_pad, 1), f_pad).astype(compute_dtype),
        b1=_pad_last(stack("b1"), f_pad).astype(jnp.float32),
        w2=_pad_last(_pad_axis(stack("w2"), f_pad, 1), d_pad).astype(compute_dtype),
        b2=_pad_last(stack("b2"), d_pad).astype(jnp.float32),
        g2=_pad_last(stack("ln2_g"), d_pad).astype(jnp.float32),
        be2=_pad_last(stack("ln2_b"), d_pad).astype(jnp.float32),
    )


# --------------------------------------------------------------------------
# Glue: embedding lookup + precomputed sinusoidal PE, then one fused pallas_call
# --------------------------------------------------------------------------
def sinusoidal_positional_encoding(max_seq_len, d_model):
    assert d_model % 2 == 0, "d_model must be even for interleaved sin/cos PE"
    pos = jnp.arange(max_seq_len, dtype=jnp.float32)[:, None]
    div = jnp.exp(jnp.arange(0, d_model, 2, dtype=jnp.float32)
                  * (-math.log(10000.0) / d_model))
    ang = pos * div                                           # (L, d_model/2)
    return jnp.stack([jnp.sin(ang), jnp.cos(ang)],
                     axis=-1).reshape(max_seq_len, d_model)


def init_params(key, *, vocab_size, in_size, out_size, head_size, num_heads,
                fc_hidden_size, num_layers, max_seq_len):
    hd = num_heads * head_size
    keys = jax.random.split(key, 1 + num_layers)
    params = {
        "emb": jax.random.normal(keys[0], (vocab_size, in_size), jnp.float32) * 0.02,
        "pe": sinusoidal_positional_encoding(max_seq_len, in_size),
    }
    blocks = []
    for i in range(num_layers):
        d_in = in_size if i == 0 else out_size
        kq, kk, kv, ko, k1, k2 = jax.random.split(keys[1 + i], 6)
        blocks.append({
            "wq": jax.random.normal(kq, (d_in, hd), jnp.float32) * 0.02,
            "bq": jnp.zeros((1, hd), jnp.float32),
            "wk": jax.random.normal(kk, (d_in, hd), jnp.float32) * 0.02,
            "bk": jnp.zeros((1, hd), jnp.float32),
            "wv": jax.random.normal(kv, (d_in, hd), jnp.float32) * 0.02,
            "bv": jnp.zeros((1, hd), jnp.float32),
            "wo": jax.random.normal(ko, (hd, out_size), jnp.float32) * 0.02,
            "bo": jnp.zeros((1, out_size), jnp.float32),
            "ln1_g": jnp.ones((1, out_size), jnp.float32),
            "ln1_b": jnp.zeros((1, out_size), jnp.float32),
            "w1": jax.random.normal(k1, (out_size, fc_hidden_size), jnp.float32) * 0.02,
            "b1": jnp.zeros((1, fc_hidden_size), jnp.float32),
            "w2": jax.random.normal(k2, (fc_hidden_size, out_size), jnp.float32) * 0.02,
            "b2": jnp.zeros((1, out_size), jnp.float32),
            "ln2_g": jnp.ones((1, out_size), jnp.float32),
            "ln2_b": jnp.zeros((1, out_size), jnp.float32),
        })
    params["blocks"] = blocks
    return params


def transformer_encoder(token_ids, params, *, max_seq_len, num_heads, head_size,
                        compute_dtype=jnp.bfloat16):
    B, S = token_ids.shape
    assert S <= max_seq_len
    blocks = params["blocks"]
    num_layers = len(blocks)
    in_size = params["emb"].shape[1]
    out_size = blocks[0]["wo"].shape[1]
    # residual (x + attn) requires matching widths; also needed for layer stacking
    assert in_size == out_size, "TransformerEncoder residuals require in_size == out_size"

    d_pad = _round_up(out_size, 128)                 # lane-dense model dim
    f_pad = _round_up(blocks[0]["w1"].shape[1], 128)  # lane-dense FFN hidden dim
    n_rows = B * S

    # embedding lookup + precomputed sinusoidal PE (plain-JAX glue)
    emb = jnp.take(params["emb"], token_ids, axis=0)          # (B, S, D)
    x = emb + params["pe"][None, :S, :]
    x = _pad_last(x, d_pad).reshape(n_rows, d_pad).astype(jnp.float32)

    w = _stack_layer_params(blocks, d_pad, f_pad, compute_dtype)
    weight_order = ["wqkv", "bqkv", "wo", "bo", "g1", "be1",
                    "w1", "b1", "w2", "b2", "g2", "be2"]
    weights = [w[name] for name in weight_order]

    x_spec = pl.BlockSpec((n_rows, d_pad), lambda l: (0, 0))
    w_specs = [pl.BlockSpec((1,) + tuple(arr.shape[1:]), lambda l: (l, 0, 0))
               for arr in weights]
    o_spec = pl.BlockSpec((n_rows, d_pad), lambda l: (0, 0))

    kernel = functools.partial(
        _stacked_encoder_kernel, batch=B, seq=S, num_heads=num_heads,
        head_size=head_size, d_model=out_size, compute_dtype=compute_dtype)

    out = pl.pallas_call(
        kernel,
        out_shape=jax.ShapeDtypeStruct((n_rows, d_pad), jnp.float32),
        grid_spec=pltpu.PrefetchScalarGridSpec(
            num_scalar_prefetch=0,
            grid=(num_layers,),
            in_specs=[x_spec] + w_specs,
            out_specs=o_spec,
            scratch_shapes=[pltpu.VMEM((n_rows, d_pad), jnp.float32)],
        ),
        compiler_params=pltpu.CompilerParams(
            # layer axis is a sequential carry over the VMEM-resident activation
            dimension_semantics=("arbitrary",)),
    )(x, *weights)

    return out.reshape(B, S, d_pad)[:, :, :out_size]


# --------------------------------------------------------------------------
if __name__ == "__main__":
    vocab_size = 50
    in_size = 32
    out_size = 32
    head_size = 8
    num_heads = 4
    num_layers = 2
    fc_hidden_size = 64
    max_seq_len = 16
    B, S = 2, 8

    key = jax.random.PRNGKey(0)
    k_tok, k_par = jax.random.split(key)
    token_ids = jax.random.randint(k_tok, (B, S), 0, vocab_size, dtype=jnp.int32)
    params = init_params(k_par, vocab_size=vocab_size, in_size=in_size,
                         out_size=out_size, head_size=head_size,
                         num_heads=num_heads, fc_hidden_size=fc_hidden_size,
                         num_layers=num_layers, max_seq_len=max_seq_len)

    fwd = jax.jit(functools.partial(transformer_encoder, max_seq_len=max_seq_len,
                                    num_heads=num_heads, head_size=head_size))
    out = fwd(token_ids, params)
    out = jax.block_until_ready(out)
    assert out.shape == (B, S, out_size)
    assert bool(jnp.all(jnp.isfinite(out)))
    print("KERNEL_OK")
</pallas_src>

<mosaic_0001>
module attributes {stable_mosaic.version = 11 : i64} {
  func.func @_stacked_encoder_kernel(%arg0: i32, %arg1: memref<16x128xf32, #tpu.memory_space<vmem>>, %arg2: memref<1x128x96xbf16, #tpu.memory_space<vmem>>, %arg3: memref<1x1x96xf32, #tpu.memory_space<vmem>>, %arg4: memref<1x32x128xbf16, #tpu.memory_space<vmem>>, %arg5: memref<1x1x128xf32, #tpu.memory_space<vmem>>, %arg6: memref<1x1x128xf32, #tpu.memory_space<vmem>>, %arg7: memref<1x1x128xf32, #tpu.memory_space<vmem>>, %arg8: memref<1x128x128xbf16, #tpu.memory_space<vmem>>, %arg9: memref<1x1x128xf32, #tpu.memory_space<vmem>>, %arg10: memref<1x128x128xbf16, #tpu.memory_space<vmem>>, %arg11: memref<1x1x128xf32, #tpu.memory_space<vmem>>, %arg12: memref<1x1x128xf32, #tpu.memory_space<vmem>>, %arg13: memref<1x1x128xf32, #tpu.memory_space<vmem>>, %arg14: memref<16x128xf32, #tpu.memory_space<vmem>>, %arg15: memref<16x128xf32, #tpu.memory_space<vmem>>) attributes {dimension_semantics = [#tpu.dimension_semantics<arbitrary>], iteration_bounds = array<i64: 2>, scalar_prefetch = 0 : i64, scratch_operands = 1 : i64, tpu.core_type = #tpu.core_type<tc>, window_params = [{pipeline_mode = #tpu.pipeline_mode<synchronous>, transform_indices = @transform_0, window_bounds = array<i64: 16, 128>}, {transform_indices = @transform_1, window_bounds = array<i64: 1, 128, 96>}, {transform_indices = @transform_2, window_bounds = array<i64: 1, 1, 96>}, {transform_indices = @transform_3, window_bounds = array<i64: 1, 32, 128>}, {transform_indices = @transform_4, window_bounds = array<i64: 1, 1, 128>}, {transform_indices = @transform_5, window_bounds = array<i64: 1, 1, 128>}, {transform_indices = @transform_6, window_bounds = array<i64: 1, 1, 128>}, {transform_indices = @transform_7, window_bounds = array<i64: 1, 128, 128>}, {transform_indices = @transform_8, window_bounds = array<i64: 1, 1, 128>}, {transform_indices = @transform_9, window_bounds = array<i64: 1, 128, 128>}, {transform_indices = @transform_10, window_bounds = array<i64: 1, 1, 128>}, {transform_indices = @transform_11, window_bounds = array<i64: 1, 1, 128>}, {transform_indices = @transform_12, window_bounds = array<i64: 1, 1, 128>}, {pipeline_mode = #tpu.pipeline_mode<synchronous>, transform_indices = @transform_13, window_bounds = array<i64: 16, 128>}]} {
    %c0_i32 = arith.constant 0 : i32
    %0 = arith.cmpi eq, %arg0, %c0_i32 : i32
    %1 = arith.extui %0 : i1 to i32
    %c0_i32_0 = arith.constant 0 : i32
    %2 = arith.cmpi ne, %1, %c0_i32_0 : i32
    scf.if %2 {
      %c0_80 = arith.constant 0 : index
      %c0_81 = arith.constant 0 : index
      %212 = vector.load %arg1[%c0_80, %c0_81] : memref<16x128xf32, #tpu.memory_space<vmem>>, vector<16x128xf32>
      %c0_82 = arith.constant 0 : index
      %c0_83 = arith.constant 0 : index
      %213 = vector.load %arg15[%c0_82, %c0_83] : memref<16x128xf32, #tpu.memory_space<vmem>>, vector<16x128xf32>
      tpu.vector_store %arg15[%c0_82, %c0_83], %212 {strides = array<i32>} : memref<16x128xf32, #tpu.memory_space<vmem>>, vector<16x128xf32>,
    } else {
    }
    %c0 = arith.constant 0 : index
    %c0_1 = arith.constant 0 : index
    %3 = vector.load %arg15[%c0, %c0_1] : memref<16x128xf32, #tpu.memory_space<vmem>>, vector<16x128xf32>
    %4 = tpu.iota {dimensions = array<i32: 1>} : vector<1x128xi32>
    %c32_i32 = arith.constant 32 : i32
    %5 = vector.broadcast %c32_i32 : i32 to vector<1x128xi32>
    %6 = arith.cmpi slt, %4, %5 : vector<1x128xi32>
    %7 = arith.extui %6 : vector<1x128xi1> to vector<1x128xi32>
    %8 = arith.sitofp %7 : vector<1x128xi32> to vector<1x128xf32>
    %9 = arith.truncf %3 : vector<16x128xf32> to vector<16x128xbf16>
    %c0_2 = arith.constant 0 : index
    %c0_3 = arith.constant 0 : index
    %c0_4 = arith.constant 0 : index
    %10 = vector.load %arg2[%c0_2, %c0_3, %c0_4] : memref<1x128x96xbf16, #tpu.memory_space<vmem>>, vector<1x128x96xbf16>
    %11 = vector.shape_cast %10 : vector<1x128x96xbf16> to vector<128x96xbf16>
    %cst = arith.constant dense<0.000000e+00> : vector<16x96xf32>
    %12 = tpu.matmul %9, %11, %cst {dimension_numbers = #tpu.dot_dimension_numbers<[1], [0], [0], [1], [0, 0, 1, 1], [], []>} : vector<16x128xbf16>, vector<128x96xbf16>, vector<16x96xf32> -> vector<16x96xf32>
    %c0_5 = arith.constant 0 : index
    %c0_6 = arith.constant 0 : index
    %c0_7 = arith.constant 0 : index
    %13 = vector.load %arg3[%c0_5, %c0_6, %c0_7] : memref<1x1x96xf32, #tpu.memory_space<vmem>>, vector<1x1x96xf32>
    %14 = vector.shape_cast %13 : vector<1x1x96xf32> to vector<1x96xf32>
    %15 = vector.broadcast %14 : vector<1x96xf32> to vector<16x96xf32>
    %16 = arith.addf %12, %15 : vector<16x96xf32>
    %17 = vector.extract_strided_slice %16 {offsets = [0, 0], sizes = [16, 32], strides = [1, 1]} : vector<16x96xf32> to vector<16x32xf32>
    %18 = vector.shape_cast %17 : vector<16x32xf32> to vector<2x8x32xf32>
    %19 = vector.extract_strided_slice %16 {offsets = [0, 32], sizes = [16, 32], strides = [1, 1]} : vector<16x96xf32> to vector<16x32xf32>
    %20 = vector.shape_cast %19 : vector<16x32xf32> to vector<2x8x32xf32>
    %21 = vector.extract_strided_slice %16 {offsets = [0, 64], sizes = [16, 32], strides = [1, 1]} : vector<16x96xf32> to vector<16x32xf32>
    %22 = vector.shape_cast %21 : vector<16x32xf32> to vector<2x8x32xf32>
    %c0_8 = arith.constant 0 : index
    %c0_9 = arith.constant 0 : index
    %c0_10 = arith.constant 0 : index
    %23 = vector.load %arg4[%c0_8, %c0_9, %c0_10] : memref<1x32x128xbf16, #tpu.memory_space<vmem>>, vector<1x32x128xbf16>
    %24 = vector.shape_cast %23 : vector<1x32x128xbf16> to vector<32x128xbf16>
    %cst_11 = arith.constant 0.000000e+00 : f32
    %25 = vector.broadcast %cst_11 : f32 to vector<16x128xf32>
    %26 = vector.extract_strided_slice %18 {offsets = [0, 0, 0], sizes = [2, 8, 8], strides = [1, 1, 1]} : vector<2x8x32xf32> to vector<2x8x8xf32>
    %27 = arith.truncf %26 : vector<2x8x8xf32> to vector<2x8x8xbf16>
    %28 = vector.extract_strided_slice %20 {offsets = [0, 0, 0], sizes = [2, 8, 8], strides = [1, 1, 1]} : vector<2x8x32xf32> to vector<2x8x8xf32>
    %29 = arith.truncf %28 : vector<2x8x8xf32> to vector<2x8x8xbf16>
    %30 = vector.extract_strided_slice %22 {offsets = [0, 0, 0], sizes = [2, 8, 8], strides = [1, 1, 1]} : vector<2x8x32xf32> to vector<2x8x8xf32>
    %31 = arith.truncf %30 : vector<2x8x8xf32> to vector<2x8x8xbf16>
    "tpu.trace_start"() <{level = 10 : i32, message = "bqd,bkd->bqk"}> : () -> ()
    %cst_12 = arith.constant dense<0.000000e+00> : vector<2x8x8xf32>
    %32 = tpu.matmul %27, %29, %cst_12 {dimension_numbers = #tpu.dot_dimension_numbers<[2], [2], [1], [1], [0, 0, 0, 1, 1, 1], [0], [0]>} : vector<2x8x8xbf16>, vector<2x8x8xbf16>, vector<2x8x8xf32> -> vector<2x8x8xf32>
    "tpu.trace_stop"() : () -> ()
    %cst_13 = arith.constant 0.353553385 : f32
    %33 = vector.broadcast %cst_13 : f32 to vector<2x8x8xf32>
    %34 = arith.mulf %32, %33 : vector<2x8x8xf32>
    %cst_14 = arith.constant dense<0xFF800000> : vector<2x8xf32>
    %35 = vector.multi_reduction <maximumf>, %34, %cst_14 [2] : vector<2x8x8xf32> to vector<2x8xf32>
    %36 = vector.shape_cast %35 : vector<2x8xf32> to vector<2x8x1xf32>
    %37 = vector.broadcast %36 : vector<2x8x1xf32> to vector<2x8x8xf32>
    %38 = arith.subf %34, %37 : vector<2x8x8xf32>
    %39 = math.exp %38 : vector<2x8x8xf32>
    %cst_15 = arith.constant dense<0.000000e+00> : vector<2x8xf32>
    %40 = vector.multi_reduction <add>, %39, %cst_15 [2] : vector<2x8x8xf32> to vector<2x8xf32>
    %41 = vector.shape_cast %40 : vector<2x8xf32> to vector<2x8x1xf32>
    %42 = arith.truncf %39 : vector<2x8x8xf32> to vector<2x8x8xbf16>
    "tpu.trace_start"() <{level = 10 : i32, message = "bqk,bkd->bqd"}> : () -> ()
    %cst_16 = arith.constant dense<0.000000e+00> : vector<2x8x8xf32>
    %43 = tpu.matmul %42, %31, %cst_16 {dimension_numbers = #tpu.dot_dimension_numbers<[2], [1], [1], [2], [0, 0, 0, 1, 1, 2], [0], [0]>} : vector<2x8x8xbf16>, vector<2x8x8xbf16>, vector<2x8x8xf32> -> vector<2x8x8xf32>
    "tpu.trace_stop"() : () -> ()
    %44 = tpu.reciprocal %41 {approx = true} : vector<2x8x1xf32> -> vector<2x8x1xf32>
    %45 = vector.broadcast %44 : vector<2x8x1xf32> to vector<2x8x8xf32>
    %46 = arith.mulf %43, %45 : vector<2x8x8xf32>
    %47 = vector.shape_cast %46 : vector<2x8x8xf32> to vector<16x8xf32>
    %48 = arith.truncf %47 : vector<16x8xf32> to vector<16x8xbf16>
    %49 = vector.extract_strided_slice %24 {offsets = [0, 0], sizes = [8, 128], strides = [1, 1]} : vector<32x128xbf16> to vector<8x128xbf16>
    %cst_17 = arith.constant dense<0.000000e+00> : vector<16x128xf32>
    %50 = tpu.matmul %48, %49, %cst_17 {dimension_numbers = #tpu.dot_dimension_numbers<[1], [0], [0], [1], [0, 0, 1, 1], [], []>} : vector<16x8xbf16>, vector<8x128xbf16>, vector<16x128xf32> -> vector<16x128xf32>
    %51 = arith.addf %25, %50 : vector<16x128xf32>
    %52 = vector.extract_strided_slice %18 {offsets = [0, 0, 8], sizes = [2, 8, 8], strides = [1, 1, 1]} : vector<2x8x32xf32> to vector<2x8x8xf32>
    %53 = arith.truncf %52 : vector<2x8x8xf32> to vector<2x8x8xbf16>
    %54 = vector.extract_strided_slice %20 {offsets = [0, 0, 8], sizes = [2, 8, 8], strides = [1, 1, 1]} : vector<2x8x32xf32> to vector<2x8x8xf32>
    %55 = arith.truncf %54 : vector<2x8x8xf32> to vector<2x8x8xbf16>
    %56 = vector.extract_strided_slice %22 {offsets = [0, 0, 8], sizes = [2, 8, 8], strides = [1, 1, 1]} : vector<2x8x32xf32> to vector<2x8x8xf32>
    %57 = arith.truncf %56 : vector<2x8x8xf32> to vector<2x8x8xbf16>
    "tpu.trace_start"() <{level = 10 : i32, message = "bqd,bkd->bqk"}> : () -> ()
    %cst_18 = arith.constant dense<0.000000e+00> : vector<2x8x8xf32>
    %58 = tpu.matmul %53, %55, %cst_18 {dimension_numbers = #tpu.dot_dimension_numbers<[2], [2], [1], [1], [0, 0, 0, 1, 1, 1], [0], [0]>} : vector<2x8x8xbf16>, vector<2x8x8xbf16>, vector<2x8x8xf32> -> vector<2x8x8xf32>
    "tpu.trace_stop"() : () -> ()
    %cst_19 = arith.constant 0.353553385 : f32
    %59 = vector.broadcast %cst_19 : f32 to vector<2x8x8xf32>
    %60 = arith.mulf %58, %59 : vector<2x8x8xf32>
    %cst_20 = arith.constant dense<0xFF800000> : vector<2x8xf32>
    %61 = vector.multi_reduction <maximumf>, %60, %cst_20 [2] : vector<2x8x8xf32> to vector<2x8xf32>
    %62 = vector.shape_cast %61 : vector<2x8xf32> to vector<2x8x1xf32>
    %63 = vector.broadcast %62 : vector<2x8x1xf32> to vector<2x8x8xf32>
    %64 = arith.subf %60, %63 : vector<2x8x8xf32>
    %65 = math.exp %64 : vector<2x8x8xf32>
    %cst_21 = arith.constant dense<0.000000e+00> : vector<2x8xf32>
    %66 = vector.multi_reduction <add>, %65, %cst_21 [2] : vector<2x8x8xf32> to vector<2x8xf32>
    %67 = vector.shape_cast %66 : vector<2x8xf32> to vector<2x8x1xf32>
    %68 = arith.truncf %65 : vector<2x8x8xf32> to vector<2x8x8xbf16>
    "tpu.trace_start"() <{level = 10 : i32, message = "bqk,bkd->bqd"}> : () -> ()
    %cst_22 = arith.constant dense<0.000000e+00> : vector<2x8x8xf32>
    %69 = tpu.matmul %68, %57, %cst_22 {dimension_numbers = #tpu.dot_dimension_numbers<[2], [1], [1], [2], [0, 0, 0, 1, 1, 2], [0], [0]>} : vector<2x8x8xbf16>, vector<2x8x8xbf16>, vector<2x8x8xf32> -> vector<2x8x8xf32>
    "tpu.trace_stop"() : () -> ()
    %70 = tpu.reciprocal %67 {approx = true} : vector<2x8x1xf32> -> vector<2x8x1xf32>
    %71 = vector.broadcast %70 : vector<2x8x1xf32> to vector<2x8x8xf32>
    %72 = arith.mulf %69, %71 : vector<2x8x8xf32>
    %73 = vector.shape_cast %72 : vector<2x8x8xf32> to vector<16x8xf32>
    %74 = arith.truncf %73 : vector<16x8xf32> to vector<16x8xbf16>
    %75 = vector.extract_strided_slice %24 {offsets = [8, 0], sizes = [8, 128], strides = [1, 1]} : vector<32x128xbf16> to vector<8x128xbf16>
    %cst_23 = arith.constant dense<0.000000e+00> : vector<16x128xf32>
    %76 = tpu.matmul %74, %75, %cst_23 {dimension_numbers = #tpu.dot_dimension_numbers<[1], [0], [0], [1], [0, 0, 1, 1], [], []>} : vector<16x8xbf16>, vector<8x128xbf16>, vector<16x128xf32> -> vector<16x128xf32>
    %77 = arith.addf %51, %76 : vector<16x128xf32>
    %78 = vector.extract_strided_slice %18 {offsets = [0, 0, 16], sizes = [2, 8, 8], strides = [1, 1, 1]} : vector<2x8x32xf32> to vector<2x8x8xf32>
    %79 = arith.truncf %78 : vector<2x8x8xf32> to vector<2x8x8xbf16>
    %80 = vector.extract_strided_slice %20 {offsets = [0, 0, 16], sizes = [2, 8, 8], strides = [1, 1, 1]} : vector<2x8x32xf32> to vector<2x8x8xf32>
    %81 = arith.truncf %80 : vector<2x8x8xf32> to vector<2x8x8xbf16>
    %82 = vector.extract_strided_slice %22 {offsets = [0, 0, 16], sizes = [2, 8, 8], strides = [1, 1, 1]} : vector<2x8x32xf32> to vector<2x8x8xf32>
    %83 = arith.truncf %82 : vector<2x8x8xf32> to vector<2x8x8xbf16>
    "tpu.trace_start"() <{level = 10 : i32, message = "bqd,bkd->bqk"}> : () -> ()
    %cst_24 = arith.constant dense<0.000000e+00> : vector<2x8x8xf32>
    %84 = tpu.matmul %79, %81, %cst_24 {dimension_numbers = #tpu.dot_dimension_numbers<[2], [2], [1], [1], [0, 0, 0, 1, 1, 1], [0], [0]>} : vector<2x8x8xbf16>, vector<2x8x8xbf16>, vector<2x8x8xf32> -> vector<2x8x8xf32>
    "tpu.trace_stop"() : () -> ()
    %cst_25 = arith.constant 0.353553385 : f32
    %85 = vector.broadcast %cst_25 : f32 to vector<2x8x8xf32>
    %86 = arith.mulf %84, %85 : vector<2x8x8xf32>
    %cst_26 = arith.constant dense<0xFF800000> : vector<2x8xf32>
    %87 = vector.multi_reduction <maximumf>, %86, %cst_26 [2] : vector<2x8x8xf32> to vector<2x8xf32>
    %88 = vector.shape_cast %87 : vector<2x8xf32> to vector<2x8x1xf32>
    %89 = vector.broadcast %88 : vector<2x8x1xf32> to vector<2x8x8xf32>
    %90 = arith.subf %86, %89 : vector<2x8x8xf32>
    %91 = math.exp %90 : vector<2x8x8xf32>
    %cst_27 = arith.constant dense<0.000000e+00> : vector<2x8xf32>
    %92 = vector.multi_reduction <add>, %91, %cst_27 [2] : vector<2x8x8xf32> to vector<2x8xf32>
    %93 = vector.shape_cast %92 : vector<2x8xf32> to vector<2x8x1xf32>
    %94 = arith.truncf %91 : vector<2x8x8xf32> to vector<2x8x8xbf16>
    "tpu.trace_start"() <{level = 10 : i32, message = "bqk,bkd->bqd"}> : () -> ()
    %cst_28 = arith.constant dense<0.000000e+00> : vector<2x8x8xf32>
    %95 = tpu.matmul %94, %83, %cst_28 {dimension_numbers = #tpu.dot_dimension_numbers<[2], [1], [1], [2], [0, 0, 0, 1, 1, 2], [0], [0]>} : vector<2x8x8xbf16>, vector<2x8x8xbf16>, vector<2x8x8xf32> -> vector<2x8x8xf32>
    "tpu.trace_stop"() : () -> ()
    %96 = tpu.reciprocal %93 {approx = true} : vector<2x8x1xf32> -> vector<2x8x1xf32>
    %97 = vector.broadcast %96 : vector<2x8x1xf32> to vector<2x8x8xf32>
    %98 = arith.mulf %95, %97 : vector<2x8x8xf32>
    %99 = vector.shape_cast %98 : vector<2x8x8xf32> to vector<16x8xf32>
    %100 = arith.truncf %99 : vector<16x8xf32> to vector<16x8xbf16>
    %101 = vector.extract_strided_slice %24 {offsets = [16, 0], sizes = [8, 128], strides = [1, 1]} : vector<32x128xbf16> to vector<8x128xbf16>
    %cst_29 = arith.constant dense<0.000000e+00> : vector<16x128xf32>
    %102 = tpu.matmul %100, %101, %cst_29 {dimension_numbers = #tpu.dot_dimension_numbers<[1], [0], [0], [1], [0, 0, 1, 1], [], []>} : vector<16x8xbf16>, vector<8x128xbf16>, vector<16x128xf32> -> vector<16x128xf32>
    %103 = arith.addf %77, %102 : vector<16x128xf32>
    %104 = vector.extract_strided_slice %18 {offsets = [0, 0, 24], sizes = [2, 8, 8], strides = [1, 1, 1]} : vector<2x8x32xf32> to vector<2x8x8xf32>
    %105 = arith.truncf %104 : vector<2x8x8xf32> to vector<2x8x8xbf16>
    %106 = vector.extract_strided_slice %20 {offsets = [0, 0, 24], sizes = [2, 8, 8], strides = [1, 1, 1]} : vector<2x8x32xf32> to vector<2x8x8xf32>
    %107 = arith.truncf %106 : vector<2x8x8xf32> to vector<2x8x8xbf16>
    %108 = vector.extract_strided_slice %22 {offsets = [0, 0, 24], sizes = [2, 8, 8], strides = [1, 1, 1]} : vector<2x8x32xf32> to vector<2x8x8xf32>
    %109 = arith.truncf %108 : vector<2x8x8xf32> to vector<2x8x8xbf16>
    "tpu.trace_start"() <{level = 10 : i32, message = "bqd,bkd->bqk"}> : () -> ()
    %cst_30 = arith.constant dense<0.000000e+00> : vector<2x8x8xf32>
    %110 = tpu.matmul %105, %107, %cst_30 {dimension_numbers = #tpu.dot_dimension_numbers<[2], [2], [1], [1], [0, 0, 0, 1, 1, 1], [0], [0]>} : vector<2x8x8xbf16>, vector<2x8x8xbf16>, vector<2x8x8xf32> -> vector<2x8x8xf32>
    "tpu.trace_stop"() : () -> ()
    %cst_31 = arith.constant 0.353553385 : f32
    %111 = vector.broadcast %cst_31 : f32 to vector<2x8x8xf32>
    %112 = arith.mulf %110, %111 : vector<2x8x8xf32>
    %cst_32 = arith.constant dense<0xFF800000> : vector<2x8xf32>
    %113 = vector.multi_reduction <maximumf>, %112, %cst_32 [2] : vector<2x8x8xf32> to vector<2x8xf32>
    %114 = vector.shape_cast %113 : vector<2x8xf32> to vector<2x8x1xf32>
    %115 = vector.broadcast %114 : vector<2x8x1xf32> to vector<2x8x8xf32>
    %116 = arith.subf %112, %115 : vector<2x8x8xf32>
    %117 = math.exp %116 : vector<2x8x8xf32>
    %cst_33 = arith.constant dense<0.000000e+00> : vector<2x8xf32>
    %118 = vector.multi_reduction <add>, %117, %cst_33 [2] : vector<2x8x8xf32> to vector<2x8xf32>
    %119 = vector.shape_cast %118 : vector<2x8xf32> to vector<2x8x1xf32>
    %120 = arith.truncf %117 : vector<2x8x8xf32> to vector<2x8x8xbf16>
    "tpu.trace_start"() <{level = 10 : i32, message = "bqk,bkd->bqd"}> : () -> ()
    %cst_34 = arith.constant dense<0.000000e+00> : vector<2x8x8xf32>
    %121 = tpu.matmul %120, %109, %cst_34 {dimension_numbers = #tpu.dot_dimension_numbers<[2], [1], [1], [2], [0, 0, 0, 1, 1, 2], [0], [0]>} : vector<2x8x8xbf16>, vector<2x8x8xbf16>, vector<2x8x8xf32> -> vector<2x8x8xf32>
    "tpu.trace_stop"() : () -> ()
    %122 = tpu.reciprocal %119 {approx = true} : vector<2x8x1xf32> -> vector<2x8x1xf32>
    %123 = vector.broadcast %122 : vector<2x8x1xf32> to vector<2x8x8xf32>
    %124 = arith.mulf %121, %123 : vector<2x8x8xf32>
    %125 = vector.shape_cast %124 : vector<2x8x8xf32> to vector<16x8xf32>
    %126 = arith.truncf %125 : vector<16x8xf32> to vector<16x8xbf16>
    %127 = vector.extract_strided_slice %24 {offsets = [24, 0], sizes = [8, 128], strides = [1, 1]} : vector<32x128xbf16> to vector<8x128xbf16>
    %cst_35 = arith.constant dense<0.000000e+00> : vector<16x128xf32>
    %128 = tpu.matmul %126, %127, %cst_35 {dimension_numbers = #tpu.dot_dimension_numbers<[1], [0], [0], [1], [0, 0, 1, 1], [], []>} : vector<16x8xbf16>, vector<8x128xbf16>, vector<16x128xf32> -> vector<16x128xf32>
    %129 = arith.addf %103, %128 : vector<16x128xf32>
    %c0_36 = arith.constant 0 : index
    %c0_37 = arith.constant 0 : index
    %c0_38 = arith.constant 0 : index
    %130 = vector.load %arg5[%c0_36, %c0_37, %c0_38] : memref<1x1x128xf32, #tpu.memory_space<vmem>>, vector<1x1x128xf32>
    %131 = vector.shape_cast %130 : vector<1x1x128xf32> to vector<1x128xf32>
    %132 = vector.broadcast %131 : vector<1x128xf32> to vector<16x128xf32>
    %133 = arith.addf %129, %132 : vector<16x128xf32>
    %134 = arith.addf %3, %133 : vector<16x128xf32>
    %c0_39 = arith.constant 0 : index
    %c0_40 = arith.constant 0 : index
    %c0_41 = arith.constant 0 : index
    %135 = vector.load %arg6[%c0_39, %c0_40, %c0_41] : memref<1x1x128xf32, #tpu.memory_space<vmem>>, vector<1x1x128xf32>
    %136 = vector.shape_cast %135 : vector<1x1x128xf32> to vector<1x128xf32>
    %c0_42 = arith.constant 0 : index
    %c0_43 = arith.constant 0 : index
    %c0_44 = arith.constant 0 : index
    %137 = vector.load %arg7[%c0_42, %c0_43, %c0_44] : memref<1x1x128xf32, #tpu.memory_space<vmem>>, vector<1x1x128xf32>
    %138 = vector.shape_cast %137 : vector<1x1x128xf32> to vector<1x128xf32>
    %139 = vector.broadcast %8 : vector<1x128xf32> to vector<16x128xf32>
    %140 = arith.mulf %134, %139 : vector<16x128xf32>
    %cst_45 = arith.constant dense<0.000000e+00> : vector<16xf32>
    %141 = vector.multi_reduction <add>, %140, %cst_45 [1] : vector<16x128xf32> to vector<16xf32>
    %142 = vector.shape_cast %141 : vector<16xf32> to vector<16x1xf32>
    %cst_46 = arith.constant 3.125000e-02 : f32
    %143 = vector.broadcast %cst_46 : f32 to vector<16x1xf32>
    %144 = arith.mulf %142, %143 : vector<16x1xf32>
    %145 = vector.broadcast %144 : vector<16x1xf32> to vector<16x128xf32>
    %146 = arith.subf %140, %145 : vector<16x128xf32>
    %147 = vector.broadcast %8 : vector<1x128xf32> to vector<16x128xf32>
    %148 = arith.mulf %146, %147 : vector<16x128xf32>
    %149 = arith.mulf %148, %148 : vector<16x128xf32>
    %cst_47 = arith.constant dense<0.000000e+00> : vector<16xf32>
    %150 = vector.multi_reduction <add>, %149, %cst_47 [1] : vector<16x128xf32> to vector<16xf32>
    %151 = vector.shape_cast %150 : vector<16xf32> to vector<16x1xf32>
    %cst_48 = arith.constant 3.125000e-02 : f32
    %152 = vector.broadcast %cst_48 : f32 to vector<16x1xf32>
    %153 = arith.mulf %151, %152 : vector<16x1xf32>
    %cst_49 = arith.constant 9.99999974E-6 : f32
    %154 = vector.broadcast %cst_49 : f32 to vector<16x1xf32>
    %155 = arith.addf %153, %154 : vector<16x1xf32>
    %156 = math.rsqrt %155 : vector<16x1xf32>
    %157 = vector.broadcast %156 : vector<16x1xf32> to vector<16x128xf32>
    %158 = arith.mulf %148, %157 : vector<16x128xf32>
    %159 = vector.broadcast %136 : vector<1x128xf32> to vector<16x128xf32>
    %160 = arith.mulf %158, %159 : vector<16x128xf32>
    %161 = vector.broadcast %138 : vector<1x128xf32> to vector<16x128xf32>
    %162 = arith.addf %160, %161 : vector<16x128xf32>
    %163 = arith.truncf %162 : vector<16x128xf32> to vector<16x128xbf16>
    %c0_50 = arith.constant 0 : index
    %c0_51 = arith.constant 0 : index
    %c0_52 = arith.constant 0 : index
    %164 = vector.load %arg8[%c0_50, %c0_51, %c0_52] : memref<1x128x128xbf16, #tpu.memory_space<vmem>>, vector<1x128x128xbf16>
    %165 = vector.shape_cast %164 : vector<1x128x128xbf16> to vector<128x128xbf16>
    %cst_53 = arith.constant dense<0.000000e+00> : vector<16x128xf32>
    %166 = tpu.matmul %163, %165, %cst_53 {dimension_numbers = #tpu.dot_dimension_numbers<[1], [0], [0], [1], [0, 0, 1, 1], [], []>} : vector<16x128xbf16>, vector<128x128xbf16>, vector<16x128xf32> -> vector<16x128xf32>
    %c0_54 = arith.constant 0 : index
    %c0_55 = arith.constant 0 : index
    %c0_56 = arith.constant 0 : index
    %167 = vector.load %arg9[%c0_54, %c0_55, %c0_56] : memref<1x1x128xf32, #tpu.memory_space<vmem>>, vector<1x1x128xf32>
    %168 = vector.shape_cast %167 : vector<1x1x128xf32> to vector<1x128xf32>
    %169 = vector.broadcast %168 : vector<1x128xf32> to vector<16x128xf32>
    %170 = arith.addf %166, %169 : vector<16x128xf32>
    %cst_57 = arith.constant 0.000000e+00 : f32
    %171 = vector.broadcast %cst_57 : f32 to vector<16x128xf32>
    %172 = arith.maximumf %170, %171 : vector<16x128xf32>
    %173 = arith.truncf %172 : vector<16x128xf32> to vector<16x128xbf16>
    %c0_58 = arith.constant 0 : index
    %c0_59 = arith.constant 0 : index
    %c0_60 = arith.constant 0 : index
    %174 = vector.load %arg10[%c0_58, %c0_59, %c0_60] : memref<1x128x128xbf16, #tpu.memory_space<vmem>>, vector<1x128x128xbf16>
    %175 = vector.shape_cast %174 : vector<1x128x128xbf16> to vector<128x128xbf16>
    %cst_61 = arith.constant dense<0.000000e+00> : vector<16x128xf32>
    %176 = tpu.matmul %173, %175, %cst_61 {dimension_numbers = #tpu.dot_dimension_numbers<[1], [0], [0], [1], [0, 0, 1, 1], [], []>} : vector<16x128xbf16>, vector<128x128xbf16>, vector<16x128xf32> -> vector<16x128xf32>
    %c0_62 = arith.constant 0 : index
    %c0_63 = arith.constant 0 : index
    %c0_64 = arith.constant 0 : index
    %177 = vector.load %arg11[%c0_62, %c0_63, %c0_64] : memref<1x1x128xf32, #tpu.memory_space<vmem>>, vector<1x1x128xf32>
    %178 = vector.shape_cast %177 : vector<1x1x128xf32> to vector<1x128xf32>
    %179 = vector.broadcast %178 : vector<1x128xf32> to vector<16x128xf32>
    %180 = arith.addf %176, %179 : vector<16x128xf32>
    %181 = arith.addf %162, %180 : vector<16x128xf32>
    %c0_65 = arith.constant 0 : index
    %c0_66 = arith.constant 0 : index
    %c0_67 = arith.constant 0 : index
    %182 = vector.load %arg12[%c0_65, %c0_66, %c0_67] : memref<1x1x128xf32, #tpu.memory_space<vmem>>, vector<1x1x128xf32>
    %183 = vector.shape_cast %182 : vector<1x1x128xf32> to vector<1x128xf32>
    %c0_68 = arith.constant 0 : index
    %c0_69 = arith.constant 0 : index
    %c0_70 = arith.constant 0 : index
    %184 = vector.load %arg13[%c0_68, %c0_69, %c0_70] : memref<1x1x128xf32, #tpu.memory_space<vmem>>, vector<1x1x128xf32>
    %185 = vector.shape_cast %184 : vector<1x1x128xf32> to vector<1x128xf32>
    %186 = vector.broadcast %8 : vector<1x128xf32> to vector<16x128xf32>
    %187 = arith.mulf %181, %186 : vector<16x128xf32>
    %cst_71 = arith.constant dense<0.000000e+00> : vector<16xf32>
    %188 = vector.multi_reduction <add>, %187, %cst_71 [1] : vector<16x128xf32> to vector<16xf32>
    %189 = vector.shape_cast %188 : vector<16xf32> to vector<16x1xf32>
    %cst_72 = arith.constant 3.125000e-02 : f32
    %190 = vector.broadcast %cst_72 : f32 to vector<16x1xf32>
    %191 = arith.mulf %189, %190 : vector<16x1xf32>
    %192 = vector.broadcast %191 : vector<16x1xf32> to vector<16x128xf32>
    %193 = arith.subf %187, %192 : vector<16x128xf32>
    %194 = vector.broadcast %8 : vector<1x128xf32> to vector<16x128xf32>
    %195 = arith.mulf %193, %194 : vector<16x128xf32>
    %196 = arith.mulf %195, %195 : vector<16x128xf32>
    %cst_73 = arith.constant dense<0.000000e+00> : vector<16xf32>
    %197 = vector.multi_reduction <add>, %196, %cst_73 [1] : vector<16x128xf32> to vector<16xf32>
    %198 = vector.shape_cast %197 : vector<16xf32> to vector<16x1xf32>
    %cst_74 = arith.constant 3.125000e-02 : f32
    %199 = vector.broadcast %cst_74 : f32 to vector<16x1xf32>
    %200 = arith.mulf %198, %199 : vector<16x1xf32>
    %cst_75 = arith.constant 9.99999974E-6 : f32
    %201 = vector.broadcast %cst_75 : f32 to vector<16x1xf32>
    %202 = arith.addf %200, %201 : vector<16x1xf32>
    %203 = math.rsqrt %202 : vector<16x1xf32>
    %204 = vector.broadcast %203 : vector<16x1xf32> to vector<16x128xf32>
    %205 = arith.mulf %195, %204 : vector<16x128xf32>
    %206 = vector.broadcast %183 : vector<1x128xf32> to vector<16x128xf32>
    %207 = arith.mulf %205, %206 : vector<16x128xf32>
    %208 = vector.broadcast %185 : vector<1x128xf32> to vector<16x128xf32>
    %209 = arith.addf %207, %208 : vector<16x128xf32>
    %c0_76 = arith.constant 0 : index
    %c0_77 = arith.constant 0 : index
    %210 = vector.load %arg15[%c0_76, %c0_77] : memref<16x128xf32, #tpu.memory_space<vmem>>, vector<16x128xf32>
    tpu.vector_store %arg15[%c0_76, %c0_77], %209 {strides = array<i32>} : memref<16x128xf32, #tpu.memory_space<vmem>>, vector<16x128xf32>,
    %c0_78 = arith.constant 0 : index
    %c0_79 = arith.constant 0 : index
    %211 = vector.load %arg14[%c0_78, %c0_79] : memref<16x128xf32, #tpu.memory_space<vmem>>, vector<16x128xf32>
    tpu.vector_store %arg14[%c0_78, %c0_79], %209 {strides = array<i32>} : memref<16x128xf32, #tpu.memory_space<vmem>>, vector<16x128xf32>,
    return
  }
  func.func @transform_0(%arg0: i32) -> (i32, i32) {
    %c0_i32 = arith.constant 0 : i32
    %c0_i32_0 = arith.constant 0 : i32
    %c0_i32_1 = arith.constant 0 : i32
    return %c0_i32, %c0_i32_0 : i32, i32
  }
  func.func @transform_1(%arg0: i32) -> (i32, i32, i32) {
    %c0_i32 = arith.constant 0 : i32
    %c0_i32_0 = arith.constant 0 : i32
    %c0_i32_1 = arith.constant 0 : i32
    return %arg0, %c0_i32, %c0_i32_0 : i32, i32, i32
  }
  func.func @transform_2(%arg0: i32) -> (i32, i32, i32) {
    %c0_i32 = arith.constant 0 : i32
    %c0_i32_0 = arith.constant 0 : i32
    %c0_i32_1 = arith.constant 0 : i32
    return %arg0, %c0_i32, %c0_i32_0 : i32, i32, i32
  }
  func.func @transform_3(%arg0: i32) -> (i32, i32, i32) {
    %c0_i32 = arith.constant 0 : i32
    %c0_i32_0 = arith.constant 0 : i32
    %c0_i32_1 = arith.constant 0 : i32
    return %arg0, %c0_i32, %c0_i32_0 : i32, i32, i32
  }
  func.func @transform_4(%arg0: i32) -> (i32, i32, i32) {
    %c0_i32 = arith.constant 0 : i32
    %c0_i32_0 = arith.constant 0 : i32
    %c0_i32_1 = arith.constant 0 : i32
    return %arg0, %c0_i32, %c0_i32_0 : i32, i32, i32
  }
  func.func @transform_5(%arg0: i32) -> (i32, i32, i32) {
    %c0_i32 = arith.constant 0 : i32
    %c0_i32_0 = arith.constant 0 : i32
    %c0_i32_1 = arith.constant 0 : i32
    return %arg0, %c0_i32, %c0_i32_0 : i32, i32, i32
  }
  func.func @transform_6(%arg0: i32) -> (i32, i32, i32) {
    %c0_i32 = arith.constant 0 : i32
    %c0_i32_0 = arith.constant 0 : i32
    %c0_i32_1 = arith.constant 0 : i32
    return %arg0, %c0_i32, %c0_i32_0 : i32, i32, i32
  }
  func.func @transform_7(%arg0: i32) -> (i32, i32, i32) {
    %c0_i32 = arith.constant 0 : i32
    %c0_i32_0 = arith.constant 0 : i32
    %c0_i32_1 = arith.constant 0 : i32
    return %arg0, %c0_i32, %c0_i32_0 : i32, i32, i32
  }
  func.func @transform_8(%arg0: i32) -> (i32, i32, i32) {
    %c0_i32 = arith.constant 0 : i32
    %c0_i32_0 = arith.constant 0 : i32
    %c0_i32_1 = arith.constant 0 : i32
    return %arg0, %c0_i32, %c0_i32_0 : i32, i32, i32
  }
  func.func @transform_9(%arg0: i32) -> (i32, i32, i32) {
    %c0_i32 = arith.constant 0 : i32
    %c0_i32_0 = arith.constant 0 : i32
    %c0_i32_1 = arith.constant 0 : i32
    return %arg0, %c0_i32, %c0_i32_0 : i32, i32, i32
  }
  func.func @transform_10(%arg0: i32) -> (i32, i32, i32) {
    %c0_i32 = arith.constant 0 : i32
    %c0_i32_0 = arith.constant 0 : i32
    %c0_i32_1 = arith.constant 0 : i32
    return %arg0, %c0_i32, %c0_i32_0 : i32, i32, i32
  }
  func.func @transform_11(%arg0: i32) -> (i32, i32, i32) {
    %c0_i32 = arith.constant 0 : i32
    %c0_i32_0 = arith.constant 0 : i32
    %c0_i32_1 = arith.constant 0 : i32
    return %arg0, %c0_i32, %c0_i32_0 : i32, i32, i32
  }
  func.func @transform_12(%arg0: i32) -> (i32, i32, i32) {
    %c0_i32 = arith.constant 0 : i32
    %c0_i32_0 = arith.constant 0 : i32
    %c0_i32_1 = arith.constant 0 : i32
    return %arg0, %c0_i32, %c0_i32_0 : i32, i32, i32
  }
  func.func @transform_13(%arg0: i32) -> (i32, i32) {
    %c0_i32 = arith.constant 0 : i32
    %c0_i32_0 = arith.constant 0 : i32
    %c0_i32_1 = arith.constant 0 : i32
    return %c0_i32, %c0_i32_0 : i32, i32
  }
}

</mosaic_0001>

<llo_original>
// kernel: transformer_encoder.1
$region0: #{transformer_encoder.1}
  #allocation0 [shape = 'u32[]', space=smem, size = 0x4, offset = 0x4, fixed_abs, tag = 'smem constant byte address 0x4 - core index']
  #allocation1 [shape = 'u32[144,128]{1,0:T(1,128)}', space=vmem, size = 0x12000, scoped, tag = 'internal scratch']
  #allocation2 [shape = 'f32[16,128]{1,0:T(8,128)}', space=vmem, size = 0x2000, scoped, tag = 'scratch operand']
  %s0 = inlined_call_operand.vmem [shape: f32[16,128], index: 0, kind: input, shape index: {}]
  %s1 = inlined_call_operand.vmem [shape: bf16[2,128,96], index: 1, kind: input, shape index: {}]
  %s2 = inlined_call_operand.vmem [shape: f32[2,1,96], index: 2, kind: input, shape index: {}]
  %s3 = inlined_call_operand.vmem [shape: bf16[2,32,128], index: 3, kind: input, shape index: {}]
  %s4 = inlined_call_operand.vmem [shape: f32[2,1,128], index: 4, kind: input, shape index: {}]
  %s5 = inlined_call_operand.vmem [shape: f32[2,1,128], index: 5, kind: input, shape index: {}]
  %s6 = inlined_call_operand.vmem [shape: f32[2,1,128], index: 6, kind: input, shape index: {}]
  %s7 = inlined_call_operand.vmem [shape: bf16[2,128,128], index: 7, kind: input, shape index: {}]
  %s8 = inlined_call_operand.vmem [shape: f32[2,1,128], index: 8, kind: input, shape index: {}]
  %s9 = inlined_call_operand.vmem [shape: bf16[2,128,128], index: 9, kind: input, shape index: {}]
  %s10 = inlined_call_operand.vmem [shape: f32[2,1,128], index: 10, kind: input, shape index: {}]
  %s11 = inlined_call_operand.vmem [shape: f32[2,1,128], index: 11, kind: input, shape index: {}]
  %s12 = inlined_call_operand.vmem [shape: f32[2,1,128], index: 12, kind: input, shape index: {}]
  %s13 = inlined_call_operand.hbm [shape: f32[16,128], index: 13, kind: output, shape index: {}]
  %s14 = sld [smem:[#allocation0]]
  $region89: #{transformer_encoder.1} parent=0
    _
  %s16 = ssub.s32 1, %s14
  %s17 = scalar_select 0, %s16, %s14
  $region1: #{transformer_encoder.1} parent=0
    #allocation3 [shape = 'u8[8192]{0}', space=vmem, size = 0x2000, scoped, tag = 'output window, operand 0, single buffered']
    #allocation4 [shape = 's32[2]{0}', space=sflag, size = 0x8, scoped, tag = 'scoped memory for transformer_encoder.1']
    %18 = vsyncpa [#allocation4], 0
    loop: start=0, step=1, limit=4
    $region2: #{transformer_encoder.1} parent=1 // loop_pre_header
      _
    $region3: #{transformer_encoder.1} parent=1 // loop_header
      %s20 = sphi 0, %s24
      %p21 = scmp.ge.s32.totalorder %s20, 4
      %s28 = sphi 0, %s28
      %s30 = sphi 0, %s28
      %s31 = sphi 0, %s30
      %s45 = sphi 0, %s31
      %s51 = sphi 0, %s53
      %s54 = sphi 0, %s51
      %s55 = sphi 0, %s54
      %s71 = sphi 0, %s55
      %s77 = sphi 0, %s79
      %s80 = sphi 0, %s77
      %s81 = sphi 0, %s80
      %s97 = sphi 0, %s81
      %s103 = sphi 0, %s105
      %s106 = sphi 0, %s103
      %s107 = sphi 0, %s106
      %s123 = sphi 0, %s107
      %s129 = sphi 0, %s131
      %s132 = sphi 0, %s129
      %s133 = sphi 0, %s132
      %s149 = sphi 0, %s133
      %s155 = sphi 0, %s157
      %s158 = sphi 0, %s155
      %s159 = sphi 0, %s158
      %s175 = sphi 0, %s159
      %s181 = sphi 0, %s183
      %s184 = sphi 0, %s181
      %s185 = sphi 0, %s184
      %s201 = sphi 0, %s185
      %s207 = sphi 0, %s209
      %s210 = sphi 0, %s207
      %s211 = sphi 0, %s210
      %s227 = sphi 0, %s211
      %s233 = sphi 0, %s235
      %s236 = sphi 0, %s233
      %s237 = sphi 0, %s236
      %s253 = sphi 0, %s237
      %s259 = sphi 0, %s261
      %s262 = sphi 0, %s259
      %s263 = sphi 0, %s262
      %s279 = sphi 0, %s263
      %s285 = sphi 0, %s287
      %s288 = sphi 0, %s285
      %s289 = sphi 0, %s288
      %s305 = sphi 0, %s289
      %s311 = sphi 0, %s313
      %s314 = sphi 0, %s311
      %s315 = sphi 0, %s314
      %s331 = sphi 0, %s315
      %s337 = sphi 0, %s339
      %s340 = sphi 0, %s337
      %s341 = sphi 0, %s340
      %s357 = sphi 0, %s341
      %s361 = sphi 0, %s361
      %s363 = sphi 0, %s361
      %s364 = sphi 0, %s363
      %s378 = sphi 0, %s364
    $region4: #{transformer_encoder.1} parent=1 // loop_header_branch
      %23 = sbr.rel (%p21) target = $region8
    $region5: #{transformer_encoder.1} parent=1 // loop_body
      %s25 = ssub.s32 %s20, 1
      %s26 = ssub.s32 %s20, 2
      %s27 = sadd.s32 %s20, 1
      %s29 = sadd.s32 %s28, 1
      %p32 = scmp.eq.s32.totalorder %s20, 1
      %p33 = scmp.ne.s32.totalorder %s28, %s30
      %p34 = scmp.eq.s32.totalorder %s20, 0
      %p35 = por %p33, %p34
      %p36 = scmp.ne.s32.totalorder %s28, %s30
      %p37 = scmp.eq.s32.totalorder %s25, 1
      %p38 = por %p36, %p37
      %p39 = scmp.ne.s32.totalorder %s30, %s31
      %p40 = scmp.eq.s32.totalorder %s25, 0
      %p41 = por %p39, %p40
      %p42 = scmp.ne.s32.totalorder %s30, %s31
      %p43 = scmp.eq.s32.totalorder %s26, 1
      %p44 = por %p42, %p43
      %p46 = scmp.ne.s32.totalorder %s31, %s45
      %p47 = scmp.eq.s32.totalorder %s26, 0
      %p48 = por %p46, %p47
      %s49 = ssub.s32 %s20, %s27
      %p50 = scmp.eq.s32.totalorder %s49, 0
      %s52 = sadd.s32 %s51, 1
      %s53 = scalar_select %p50, %s51, %s52
      %p56 = pneg %p50
      %p57 = scmp.eq.s32.totalorder %s20, 1
      %p58 = por %p56, %p57
      %p59 = scmp.ne.s32.totalorder %s51, %s54
      %p60 = scmp.eq.s32.totalorder %s20, 0
      %p61 = por %p59, %p60
      %p62 = scmp.ne.s32.totalorder %s51, %s54
      %p63 = scmp.eq.s32.totalorder %s25, 1
      %p64 = por %p62, %p63
      %p65 = scmp.ne.s32.totalorder %s54, %s55
      %p66 = scmp.eq.s32.totalorder %s25, 0
      %p67 = por %p65, %p66
      %p68 = scmp.ne.s32.totalorder %s54, %s55
      %p69 = scmp.eq.s32.totalorder %s26, 1
      %p70 = por %p68, %p69
      %p72 = scmp.ne.s32.totalorder %s55, %s71
      %p73 = scmp.eq.s32.totalorder %s26, 0
      %p74 = por %p72, %p73
      %s75 = ssub.s32 %s20, %s27
      %p76 = scmp.eq.s32.totalorder %s75, 0
      %s78 = sadd.s32 %s77, 1
      %s79 = scalar_select %p76, %s77, %s78
      %p82 = pneg %p76
      %p83 = scmp.eq.s32.totalorder %s20, 1
      %p84 = por %p82, %p83
      %p85 = scmp.ne.s32.totalorder %s77, %s80
      %p86 = scmp.eq.s32.totalorder %s20, 0
      %p87 = por %p85, %p86
      %p88 = scmp.ne.s32.totalorder %s77, %s80
      %p89 = scmp.eq.s32.totalorder %s25, 1
      %p90 = por %p88, %p89
      %p91 = scmp.ne.s32.totalorder %s80, %s81
      %p92 = scmp.eq.s32.totalorder %s25, 0
      %p93 = por %p91, %p92
      %p94 = scmp.ne.s32.totalorder %s80, %s81
      %p95 = scmp.eq.s32.totalorder %s26, 1
      %p96 = por %p94, %p95
      %p98 = scmp.ne.s32.totalorder %s81, %s97
      %p99 = scmp.eq.s32.totalorder %s26, 0
      %p100 = por %p98, %p99
      %s101 = ssub.s32 %s20, %s27
      %p102 = scmp.eq.s32.totalorder %s101, 0
      %s104 = sadd.s32 %s103, 1
      %s105 = scalar_select %p102, %s103, %s104
      %p108 = pneg %p102
      %p109 = scmp.eq.s32.totalorder %s20, 1
      %p110 = por %p108, %p109
      %p111 = scmp.ne.s32.totalorder %s103, %s106
      %p112 = scmp.eq.s32.totalorder %s20, 0
      %p113 = por %p111, %p112
      %p114 = scmp.ne.s32.totalorder %s103, %s106
      %p115 = scmp.eq.s32.totalorder %s25, 1
      %p116 = por %p114, %p115
      %p117 = scmp.ne.s32.totalorder %s106, %s107
      %p118 = scmp.eq.s32.totalorder %s25, 0
      %p119 = por %p117, %p118
      %p120 = scmp.ne.s32.totalorder %s106, %s107
      %p121 = scmp.eq.s32.totalorder %s26, 1
      %p122 = por %p120, %p121
      %p124 = scmp.ne.s32.totalorder %s107, %s123
      %p125 = scmp.eq.s32.totalorder %s26, 0
      %p126 = por %p124, %p125
      %s127 = ssub.s32 %s20, %s27
      %p128 = scmp.eq.s32.totalorder %s127, 0
      %s130 = sadd.s32 %s129, 1
      %s131 = scalar_select %p128, %s129, %s130
      %p134 = pneg %p128
      %p135 = scmp.eq.s32.totalorder %s20, 1
      %p136 = por %p134, %p135
      %p137 = scmp.ne.s32.totalorder %s129, %s132
      %p138 = scmp.eq.s32.totalorder %s20, 0
      %p139 = por %p137, %p138
      %p140 = scmp.ne.s32.totalorder %s129, %s132
      %p141 = scmp.eq.s32.totalorder %s25, 1
      %p142 = por %p140, %p141
      %p143 = scmp.ne.s32.totalorder %s132, %s133
      %p144 = scmp.eq.s32.totalorder %s25, 0
      %p145 = por %p143, %p144
      %p146 = scmp.ne.s32.totalorder %s132, %s133
      %p147 = scmp.eq.s32.totalorder %s26, 1
      %p148 = por %p146, %p147
      %p150 = scmp.ne.s32.totalorder %s133, %s149
      %p151 = scmp.eq.s32.totalorder %s26, 0
      %p152 = por %p150, %p151
      %s153 = ssub.s32 %s20, %s27
      %p154 = scmp.eq.s32.totalorder %s153, 0
      %s156 = sadd.s32 %s155, 1
      %s157 = scalar_select %p154, %s155, %s156
      %p160 = pneg %p154
      %p161 = scmp.eq.s32.totalorder %s20, 1
      %p162 = por %p160, %p161
      %p163 = scmp.ne.s32.totalorder %s155, %s158
      %p164 = scmp.eq.s32.totalorder %s20, 0
      %p165 = por %p163, %p164
      %p166 = scmp.ne.s32.totalorder %s155, %s158
      %p167 = scmp.eq.s32.totalorder %s25, 1
      %p168 = por %p166, %p167
      %p169 = scmp.ne.s32.totalorder %s158, %s159
      %p170 = scmp.eq.s32.totalorder %s25, 0
      %p171 = por %p169, %p170
      %p172 = scmp.ne.s32.totalorder %s158, %s159
      %p173 = scmp.eq.s32.totalorder %s26, 1
      %p174 = por %p172, %p173
      %p176 = scmp.ne.s32.totalorder %s159, %s175
      %p177 = scmp.eq.s32.totalorder %s26, 0
      %p178 = por %p176, %p177
      %s179 = ssub.s32 %s20, %s27
      %p180 = scmp.eq.s32.totalorder %s179, 0
      %s182 = sadd.s32 %s181, 1
      %s183 = scalar_select %p180, %s181, %s182
      %p186 = pneg %p180
      %p187 = scmp.eq.s32.totalorder %s20, 1
      %p188 = por %p186, %p187
      %p189 = scmp.ne.s32.totalorder %s181, %s184
      %p190 = scmp.eq.s32.totalorder %s20, 0
      %p191 = por %p189, %p190
      %p192 = scmp.ne.s32.totalorder %s181, %s184
      %p193 = scmp.eq.s32.totalorder %s25, 1
      %p194 = por %p192, %p193
      %p195 = scmp.ne.s32.totalorder %s184, %s185
      %p196 = scmp.eq.s32.totalorder %s25, 0
      %p197 = por %p195, %p196
      %p198 = scmp.ne.s32.totalorder %s184, %s185
      %p199 = scmp.eq.s32.totalorder %s26, 1
      %p200 = por %p198, %p199
      %p202 = scmp.ne.s32.totalorder %s185, %s201
      %p203 = scmp.eq.s32.totalorder %s26, 0
      %p204 = por %p202, %p203
      %s205 = ssub.s32 %s20, %s27
      %p206 = scmp.eq.s32.totalorder %s205, 0
      %s208 = sadd.s32 %s207, 1
      %s209 = scalar_select %p206, %s207, %s208
      %p212 = pneg %p206
      %p213 = scmp.eq.s32.totalorder %s20, 1
      %p214 = por %p212, %p213
      %p215 = scmp.ne.s32.totalorder %s207, %s210
      %p216 = scmp.eq.s32.totalorder %s20, 0
      %p217 = por %p215, %p216
      %p218 = scmp.ne.s32.totalorder %s207, %s210
      %p219 = scmp.eq.s32.totalorder %s25, 1
      %p220 = por %p218, %p219
      %p221 = scmp.ne.s32.totalorder %s210, %s211
      %p222 = scmp.eq.s32.totalorder %s25, 0
      %p223 = por %p221, %p222
      %p224 = scmp.ne.s32.totalorder %s210, %s211
      %p225 = scmp.eq.s32.totalorder %s26, 1
      %p226 = por %p224, %p225
      %p228 = scmp.ne.s32.totalorder %s211, %s227
      %p229 = scmp.eq.s32.totalorder %s26, 0
      %p230 = por %p228, %p229
      %s231 = ssub.s32 %s20, %s27
      %p232 = scmp.eq.s32.totalorder %s231, 0
      %s234 = sadd.s32 %s233, 1
      %s235 = scalar_select %p232, %s233, %s234
      %p238 = pneg %p232
      %p239 = scmp.eq.s32.totalorder %s20, 1
      %p240 = por %p238, %p239
      %p241 = scmp.ne.s32.totalorder %s233, %s236
      %p242 = scmp.eq.s32.totalorder %s20, 0
      %p243 = por %p241, %p242
      %p244 = scmp.ne.s32.totalorder %s233, %s236
      %p245 = scmp.eq.s32.totalorder %s25, 1
      %p246 = por %p244, %p245
      %p247 = scmp.ne.s32.totalorder %s236, %s237
      %p248 = scmp.eq.s32.totalorder %s25, 0
      %p249 = por %p247, %p248
      %p250 = scmp.ne.s32.totalorder %s236, %s237
      %p251 = scmp.eq.s32.totalorder %s26, 1
      %p252 = por %p250, %p251
      %p254 = scmp.ne.s32.totalorder %s237, %s253
      %p255 = scmp.eq.s32.totalorder %s26, 0
      %p256 = por %p254, %p255
      %s257 = ssub.s32 %s20, %s27
      %p258 = scmp.eq.s32.totalorder %s257, 0
      %s260 = sadd.s32 %s259, 1
      %s261 = scalar_select %p258, %s259, %s260
      %p264 = pneg %p258
      %p265 = scmp.eq.s32.totalorder %s20, 1
      %p266 = por %p264, %p265
      %p267 = scmp.ne.s32.totalorder %s259, %s262
      %p268 = scmp.eq.s32.totalorder %s20, 0
      %p269 = por %p267, %p268
      %p270 = scmp.ne.s32.totalorder %s259, %s262
      %p271 = scmp.eq.s32.totalorder %s25, 1
      %p272 = por %p270, %p271
      %p273 = scmp.ne.s32.totalorder %s262, %s263
      %p274 = scmp.eq.s32.totalorder %s25, 0
      %p275 = por %p273, %p274
      %p276 = scmp.ne.s32.totalorder %s262, %s263
      %p277 = scmp.eq.s32.totalorder %s26, 1
      %p278 = por %p276, %p277
      %p280 = scmp.ne.s32.totalorder %s263, %s279
      %p281 = scmp.eq.s32.totalorder %s26, 0
      %p282 = por %p280, %p281
      %s283 = ssub.s32 %s20, %s27
      %p284 = scmp.eq.s32.totalorder %s283, 0
      %s286 = sadd.s32 %s285, 1
      %s287 = scalar_select %p284, %s285, %s286
      %p290 = pneg %p284
      %p291 = scmp.eq.s32.totalorder %s20, 1
      %p292 = por %p290, %p291
      %p293 = scmp.ne.s32.totalorder %s285, %s288
      %p294 = scmp.eq.s32.totalorder %s20, 0
      %p295 = por %p293, %p294
      %p296 = scmp.ne.s32.totalorder %s285, %s288
      %p297 = scmp.eq.s32.totalorder %s25, 1
      %p298 = por %p296, %p297
      %p299 = scmp.ne.s32.totalorder %s288, %s289
      %p300 = scmp.eq.s32.totalorder %s25, 0
      %p301 = por %p299, %p300
      %p302 = scmp.ne.s32.totalorder %s288, %s289
      %p303 = scmp.eq.s32.totalorder %s26, 1
      %p304 = por %p302, %p303
      %p306 = scmp.ne.s32.totalorder %s289, %s305
      %p307 = scmp.eq.s32.totalorder %s26, 0
      %p308 = por %p306, %p307
      %s309 = ssub.s32 %s20, %s27
      %p310 = scmp.eq.s32.totalorder %s309, 0
      %s312 = sadd.s32 %s311, 1
      %s313 = scalar_select %p310, %s311, %s312
      %p316 = pneg %p310
      %p317 = scmp.eq.s32.totalorder %s20, 1
      %p318 = por %p316, %p317
      %p319 = scmp.ne.s32.totalorder %s311, %s314
      %p320 = scmp.eq.s32.totalorder %s20, 0
      %p321 = por %p319, %p320
      %p322 = scmp.ne.s32.totalorder %s311, %s314
      %p323 = scmp.eq.s32.totalorder %s25, 1
      %p324 = por %p322, %p323
      %p325 = scmp.ne.s32.totalorder %s314, %s315
      %p326 = scmp.eq.s32.totalorder %s25, 0
      %p327 = por %p325, %p326
      %p328 = scmp.ne.s32.totalorder %s314, %s315
      %p329 = scmp.eq.s32.totalorder %s26, 1
      %p330 = por %p328, %p329
      %p332 = scmp.ne.s32.totalorder %s315, %s331
      %p333 = scmp.eq.s32.totalorder %s26, 0
      %p334 = por %p332, %p333
      %s335 = ssub.s32 %s20, %s27
      %p336 = scmp.eq.s32.totalorder %s335, 0
      %s338 = sadd.s32 %s337, 1
      %s339 = scalar_select %p336, %s337, %s338
      %p342 = pneg %p336
      %p343 = scmp.eq.s32.totalorder %s20, 1
      %p344 = por %p342, %p343
      %p345 = scmp.ne.s32.totalorder %s337, %s340
      %p346 = scmp.eq.s32.totalorder %s20, 0
      %p347 = por %p345, %p346
      %p348 = scmp.ne.s32.totalorder %s337, %s340
      %p349 = scmp.eq.s32.totalorder %s25, 1
      %p350 = por %p348, %p349
      %p351 = scmp.ne.s32.totalorder %s340, %s341
      %p352 = scmp.eq.s32.totalorder %s25, 0
      %p353 = por %p351, %p352
      %p354 = scmp.ne.s32.totalorder %s340, %s341
      %p355 = scmp.eq.s32.totalorder %s26, 1
      %p356 = por %p354, %p355
      %p358 = scmp.ne.s32.totalorder %s341, %s357
      %p359 = scmp.eq.s32.totalorder %s26, 0
      %p360 = por %p358, %p359
      %s362 = sadd.s32 %s361, 1
      %p365 = scmp.eq.s32.totalorder %s20, 1
      %p366 = scmp.ne.s32.totalorder %s361, %s363
      %p367 = scmp.eq.s32.totalorder %s20, 0
      %p368 = por %p366, %p367
      %p369 = scmp.ne.s32.totalorder %s361, %s363
      %p370 = scmp.eq.s32.totalorder %s25, 1
      %p371 = por %p369, %p370
      %p372 = scmp.ne.s32.totalorder %s363, %s364
      %p373 = scmp.eq.s32.totalorder %s25, 0
      %p374 = por %p372, %p373
      %p375 = scmp.ne.s32.totalorder %s363, %s364
      %p376 = scmp.eq.s32.totalorder %s26, 1
      %p377 = por %p375, %p376
      %p379 = scmp.ne.s32.totalorder %s364, %s378
      %p380 = scmp.eq.s32.totalorder %s26, 0
      %p381 = por %p379, %p380
      %p382 = scmp.le.s32.totalorder 1, %s20
      %p383 = scmp.lt.s32.totalorder %s20, 3
      %p384 = pnand %p382, %p383
      %p385 = pneg %p384
      // Predicated region
      $region9: #{transformer_encoder.1} parent=5 // pred_check
        _
      $region10: #{transformer_encoder.1} parent=5 // pred_check_branch
        %387 = sbr.rel (%p384) target = $region12
      $region11: #{transformer_encoder.1} parent=5 // pred_region
        %s388 = ssub.s32 %s20, 1
        // Predicated region
        $region13: #{transformer_encoder.1} parent=11 // pred_check
          %p389 = pneg %p41
        $region14: #{transformer_encoder.1} parent=11 // pred_check_branch
          %391 = sbr.rel (%p389) target = $region16
        $region15: #{transformer_encoder.1} parent=11 // pred_region
          _
        $region16: #{transformer_encoder.1} parent=11 // pred_fallthru
          _
      $region12: #{transformer_encoder.1} parent=5 // pred_fallthru
        _
      %p392 = scmp.lt.s32.totalorder %s20, 2
      // Predicated region
      $region17: #{transformer_encoder.1} parent=5 // pred_check
        %p393 = pneg %p392
      $region18: #{transformer_encoder.1} parent=5 // pred_check_branch
        %395 = sbr.rel (%p393) target = $region20
      $region19: #{transformer_encoder.1} parent=5 // pred_region
        // Predicated region
        $region21: #{transformer_encoder.1} parent=19 // pred_check
          %p396 = pneg %p61
        $region22: #{transformer_encoder.1} parent=19 // pred_check_branch
          %398 = sbr.rel (%p396) target = $region24
        $region23: #{transformer_encoder.1} parent=19 // pred_region
          %p399 = scmp.lt.s32.totalorder %s20, 1
          %s400 = scalar_select %p399, %s20, 1
          %s401 = smul.addr %s400, 16
          %s402 = smul.addr %s401, 4
          %s403 = scalar_lea.vmem %s1, %s402
        $region24: #{transformer_encoder.1} parent=19 // pred_fallthru
          _
        // Predicated region
        $region25: #{transformer_encoder.1} parent=19 // pred_check
          %p404 = pneg %p87
        $region26: #{transformer_encoder.1} parent=19 // pred_check_branch
          %406 = sbr.rel (%p404) target = $region28
        $region27: #{transformer_encoder.1} parent=19 // pred_region
          %p407 = scmp.lt.s32.totalorder %s20, 1
          %s408 = scalar_select %p407, %s20, 1
          %s409 = scalar_lea.vmem %s2, %s408
        $region28: #{transformer_encoder.1} parent=19 // pred_fallthru
          _
        // Predicated region
        $region29: #{transformer_encoder.1} parent=19 // pred_check
          %p410 = pneg %p113
        $region30: #{transformer_encoder.1} parent=19 // pred_check_branch
          %412 = sbr.rel (%p410) target = $region32
        $region31: #{transformer_encoder.1} parent=19 // pred_region
          %p413 = scmp.lt.s32.totalorder %s20, 1
          %s414 = scalar_select %p413, %s20, 1
          %s415 = smul.addr %s414, 4
          %s416 = smul.addr %s415, 4
          %s417 = scalar_lea.vmem %s3, %s416
        $region32: #{transformer_encoder.1} parent=19 // pred_fallthru
          _
        // Predicated region
        $region33: #{transformer_encoder.1} parent=19 // pred_check
          %p418 = pneg %p139
        $region34: #{transformer_encoder.1} parent=19 // pred_check_branch
          %420 = sbr.rel (%p418) target = $region36
        $region35: #{transformer_encoder.1} parent=19 // pred_region
          %p421 = scmp.lt.s32.totalorder %s20, 1
          %s422 = scalar_select %p421, %s20, 1
          %s423 = scalar_lea.vmem %s4, %s422
        $region36: #{transformer_encoder.1} parent=19 // pred_fallthru
          _
        // Predicated region
        $region37: #{transformer_encoder.1} parent=19 // pred_check
          %p424 = pneg %p165
        $region38: #{transformer_encoder.1} parent=19 // pred_check_branch
          %426 = sbr.rel (%p424) target = $region40
        $region39: #{transformer_encoder.1} parent=19 // pred_region
          %p427 = scmp.lt.s32.totalorder %s20, 1
          %s428 = scalar_select %p427, %s20, 1
          %s429 = scalar_lea.vmem %s5, %s428
        $region40: #{transformer_encoder.1} parent=19 // pred_fallthru
          _
        // Predicated region
        $region41: #{transformer_encoder.1} parent=19 // pred_check
          %p430 = pneg %p191
        $region42: #{transformer_encoder.1} parent=19 // pred_check_branch
          %432 = sbr.rel (%p430) target = $region44
        $region43: #{transformer_encoder.1} parent=19 // pred_region
          %p433 = scmp.lt.s32.totalorder %s20, 1
          %s434 = scalar_select %p433, %s20, 1
          %s435 = scalar_lea.vmem %s6, %s434
        $region44: #{transformer_encoder.1} parent=19 // pred_fallthru
          _
        // Predicated region
        $region45: #{transformer_encoder.1} parent=19 // pred_check
          %p436 = pneg %p217
        $region46: #{transformer_encoder.1} parent=19 // pred_check_branch
          %438 = sbr.rel (%p436) target = $region48
        $region47: #{transformer_encoder.1} parent=19 // pred_region
          %p439 = scmp.lt.s32.totalorder %s20, 1
          %s440 = scalar_select %p439, %s20, 1
          %s441 = smul.addr %s440, 16
          %s442 = smul.addr %s441, 4
          %s443 = scalar_lea.vmem %s7, %s442
        $region48: #{transformer_encoder.1} parent=19 // pred_fallthru
          _
        // Predicated region
        $region49: #{transformer_encoder.1} parent=19 // pred_check
          %p444 = pneg %p243
        $region50: #{transformer_encoder.1} parent=19 // pred_check_branch
          %446 = sbr.rel (%p444) target = $region52
        $region51: #{transformer_encoder.1} parent=19 // pred_region
          %p447 = scmp.lt.s32.totalorder %s20, 1
          %s448 = scalar_select %p447, %s20, 1
          %s449 = scalar_lea.vmem %s8, %s448
        $region52: #{transformer_encoder.1} parent=19 // pred_fallthru
          _
        // Predicated region
        $region53: #{transformer_encoder.1} parent=19 // pred_check
          %p450 = pneg %p269
        $region54: #{transformer_encoder.1} parent=19 // pred_check_branch
          %452 = sbr.rel (%p450) target = $region56
        $region55: #{transformer_encoder.1} parent=19 // pred_region
          %p453 = scmp.lt.s32.totalorder %s20, 1
          %s454 = scalar_select %p453, %s20, 1
          %s455 = smul.addr %s454, 16
          %s456 = smul.addr %s455, 4
          %s457 = scalar_lea.vmem %s9, %s456
        $region56: #{transformer_encoder.1} parent=19 // pred_fallthru
          _
        // Predicated region
        $region57: #{transformer_encoder.1} parent=19 // pred_check
          %p458 = pneg %p295
        $region58: #{transformer_encoder.1} parent=19 // pred_check_branch
          %460 = sbr.rel (%p458) target = $region60
        $region59: #{transformer_encoder.1} parent=19 // pred_region
          %p461 = scmp.lt.s32.totalorder %s20, 1
          %s462 = scalar_select %p461, %s20, 1
          %s463 = scalar_lea.vmem %s10, %s462
        $region60: #{transformer_encoder.1} parent=19 // pred_fallthru
          _
        // Predicated region
        $region61: #{transformer_encoder.1} parent=19 // pred_check
          %p464 = pneg %p321
        $region62: #{transformer_encoder.1} parent=19 // pred_check_branch
          %466 = sbr.rel (%p464) target = $region64
        $region63: #{transformer_encoder.1} parent=19 // pred_region
          %p467 = scmp.lt.s32.totalorder %s20, 1
          %s468 = scalar_select %p467, %s20, 1
          %s469 = scalar_lea.vmem %s11, %s468
        $region64: #{transformer_encoder.1} parent=19 // pred_fallthru
          _
        // Predicated region
        $region65: #{transformer_encoder.1} parent=19 // pred_check
          %p470 = pneg %p347
        $region66: #{transformer_encoder.1} parent=19 // pred_check_branch
          %472 = sbr.rel (%p470) target = $region68
        $region67: #{transformer_encoder.1} parent=19 // pred_region
          %p473 = scmp.lt.s32.totalorder %s20, 1
          %s474 = scalar_select %p473, %s20, 1
          %s475 = scalar_lea.vmem %s12, %s474
        $region68: #{transformer_encoder.1} parent=19 // pred_fallthru
          _
      $region20: #{transformer_encoder.1} parent=5 // pred_fallthru
        _
      %p476 = scmp.le.s32.totalorder 1, %s20
      %p477 = scmp.lt.s32.totalorder %s20, 3
      %p478 = pnand %p476, %p477
      %p479 = pneg %p478
      // Predicated region
      $region69: #{transformer_encoder.1} parent=5 // pred_check
        _
      $region70: #{transformer_encoder.1} parent=5 // pred_check_branch
        %481 = sbr.rel (%p478) target = $region72
      $region71: #{transformer_encoder.1} parent=5 // pred_region
        %s482 = ssub.s32 %s20, 1
        %p483 = pneg %p41
        %p484 = pneg %p38
        %p485 = scmp.lt.s32.totalorder %s25, 1
        %s486 = scalar_select %p485, %s25, 1
        %s487 = smul.addr %s486, 16
        %s488 = smul.addr %s487, 4
        %s489 = scalar_lea.vmem %s1, %s488
        %p490 = pneg %p67
        %p491 = pneg %p64
        %p492 = scmp.lt.s32.totalorder %s25, 1
        %s493 = scalar_select %p492, %s25, 1
        %s494 = scalar_lea.vmem %s2, %s493
        %p495 = pneg %p93
        %p496 = pneg %p90
        %p497 = scmp.lt.s32.totalorder %s25, 1
        %s498 = scalar_select %p497, %s25, 1
        %s499 = smul.addr %s498, 4
        %s500 = smul.addr %s499, 4
        %s501 = scalar_lea.vmem %s3, %s500
        %p502 = pneg %p119
        %p503 = pneg %p116
        %p504 = scmp.lt.s32.totalorder %s25, 1
        %s505 = scalar_select %p504, %s25, 1
        %s506 = scalar_lea.vmem %s4, %s505
        %p507 = pneg %p145
        %p508 = pneg %p142
        %p509 = scmp.lt.s32.totalorder %s25, 1
        %s510 = scalar_select %p509, %s25, 1
        %s511 = scalar_lea.vmem %s5, %s510
        %p512 = pneg %p171
        %p513 = pneg %p168
        %p514 = scmp.lt.s32.totalorder %s25, 1
        %s515 = scalar_select %p514, %s25, 1
        %s516 = scalar_lea.vmem %s6, %s515
        %p517 = pneg %p197
        %p518 = pneg %p194
        %p519 = scmp.lt.s32.totalorder %s25, 1
        %s520 = scalar_select %p519, %s25, 1
        %s521 = smul.addr %s520, 16
        %s522 = smul.addr %s521, 4
        %s523 = scalar_lea.vmem %s7, %s522
        %p524 = pneg %p223
        %p525 = pneg %p220
        %p526 = scmp.lt.s32.totalorder %s25, 1
        %s527 = scalar_select %p526, %s25, 1
        %s528 = scalar_lea.vmem %s8, %s527
        %p529 = pneg %p249
        %p530 = pneg %p246
        %p531 = scmp.lt.s32.totalorder %s25, 1
        %s532 = scalar_select %p531, %s25, 1
        %s533 = smul.addr %s532, 16
        %s534 = smul.addr %s533, 4
        %s535 = scalar_lea.vmem %s9, %s534
        %p536 = pneg %p275
        %p537 = pneg %p272
        %p538 = scmp.lt.s32.totalorder %s25, 1
        %s539 = scalar_select %p538, %s25, 1
        %s540 = scalar_lea.vmem %s10, %s539
        %p541 = pneg %p301
        %p542 = pneg %p298
        %p543 = scmp.lt.s32.totalorder %s25, 1
        %s544 = scalar_select %p543, %s25, 1
        %s545 = scalar_lea.vmem %s11, %s544
        %p546 = pneg %p327
        %p547 = pneg %p324
        %p548 = scmp.lt.s32.totalorder %s25, 1
        %s549 = scalar_select %p548, %s25, 1
        %s550 = scalar_lea.vmem %s12, %s549
        %p551 = pneg %p353
        %p552 = pneg %p350
        %p553 = pneg %p374
        %p554 = pneg %p371
        %p555 = scmp.lt.s32.totalorder %s25, 1
        %s556 = scalar_select %p555, %s25, 1
        %s557 = smul.addr %s556, 16
        %s558 = smul.addr %s557, 4
        %s559 = scalar_lea.vmem %s1, %s558
        %p560 = scmp.lt.s32.totalorder %s25, 1
        %s561 = scalar_select %p560, %s25, 1
        %s562 = scalar_lea.vmem %s2, %s561
        %p563 = scmp.lt.s32.totalorder %s25, 1
        %s564 = scalar_select %p563, %s25, 1
        %s565 = smul.addr %s564, 4
        %s566 = smul.addr %s565, 4
        %s567 = scalar_lea.vmem %s3, %s566
        %p568 = scmp.lt.s32.totalorder %s25, 1
        %s569 = scalar_select %p568, %s25, 1
        %s570 = scalar_lea.vmem %s4, %s569
        %p571 = scmp.lt.s32.totalorder %s25, 1
        %s572 = scalar_select %p571, %s25, 1
        %s573 = scalar_lea.vmem %s5, %s572
        %p574 = scmp.lt.s32.totalorder %s25, 1
        %s575 = scalar_select %p574, %s25, 1
        %s576 = scalar_lea.vmem %s6, %s575
        %p577 = scmp.lt.s32.totalorder %s25, 1
        %s578 = scalar_select %p577, %s25, 1
        %s579 = smul.addr %s578, 16
        %s580 = smul.addr %s579, 4
        %s581 = scalar_lea.vmem %s7, %s580
        %p582 = scmp.lt.s32.totalorder %s25, 1
        %s583 = scalar_select %p582, %s25, 1
        %s584 = scalar_lea.vmem %s8, %s583
        %p585 = scmp.lt.s32.totalorder %s25, 1
        %s586 = scalar_select %p585, %s25, 1
        %s587 = smul.addr %s586, 16
        %s588 = smul.addr %s587, 4
        %s589 = scalar_lea.vmem %s9, %s588
        %p590 = scmp.lt.s32.totalorder %s25, 1
        %s591 = scalar_select %p590, %s25, 1
        %s592 = scalar_lea.vmem %s10, %s591
        %p593 = scmp.lt.s32.totalorder %s25, 1
        %s594 = scalar_select %p593, %s25, 1
        %s595 = scalar_lea.vmem %s11, %s594
        %p596 = scmp.lt.s32.totalorder %s25, 1
        %s597 = scalar_select %p596, %s25, 1
        %s598 = scalar_lea.vmem %s12, %s597
        %p600 = scmp.eq.s32.totalorder %s25, 0
        // Predicated region
        $region73: #{transformer_encoder.1} parent=71 // pred_check
          %p601 = pneg %p600
        $region74: #{transformer_encoder.1} parent=71 // pred_check_branch
          %603 = sbr.rel (%p601) target = $region76
        $region75: #{transformer_encoder.1} parent=71 // pred_region
          %v604 = vld [vmem:[%s0] sm:$0xff]
          %v605 = vld [vmem:[%s0 + $0x8] sm:$0xff]
          %606 = vst [vmem:[#allocation2] sm:$0xff] %v604
          %607 = vst [vmem:[#allocation2 + $0x8] sm:$0xff] %v605
        $region76: #{transformer_encoder.1} parent=71 // pred_fallthru
          _
        %v608 = vld [vmem:[#allocation2] sm:$0xff]
        %v609 = vld [vmem:[#allocation2 + $0x8] sm:$0xff]
        %v610 = vlaneseq
        %v611 = vand.u32 %v610, 127
        %vm612 = vcmp.lt.s32.totalorder %v611, 32
        %v613 = vsel %vm612, 1, 0
        %v614 = vcvt.s32.f32 %v613
        %v615 = vpack.c.bf16 %v609, %v608
        %v616 = vld [vmem:[%s559] sm:$0xf]
        %v617 = vld [vmem:[%s559 + $0x4] sm:$0xf]
        %v618 = vld [vmem:[%s559 + $0x8] sm:$0xf]
        %v619 = vld [vmem:[%s559 + $0xc] sm:$0xf]
        %v620 = vld [vmem:[%s559 + $0x10] sm:$0xf]
        %v621 = vld [vmem:[%s559 + $0x14] sm:$0xf]
        %v622 = vld [vmem:[%s559 + $0x18] sm:$0xf]
        %v623 = vld [vmem:[%s559 + $0x1c] sm:$0xf]
        %v624 = vld [vmem:[%s559 + $0x20] sm:$0xf]
        %v625 = vld [vmem:[%s559 + $0x24] sm:$0xf]
        %v626 = vld [vmem:[%s559 + $0x28] sm:$0xf]
        %v627 = vld [vmem:[%s559 + $0x2c] sm:$0xf]
        %v628 = vld [vmem:[%s559 + $0x30] sm:$0xf]
        %v629 = vld [vmem:[%s559 + $0x34] sm:$0xf]
        %v630 = vld [vmem:[%s559 + $0x38] sm:$0xf]
        %v631 = vld [vmem:[%s559 + $0x3c] sm:$0xf]
        %v632 = vld [vmem:[%s562] sm:$0x1]
        %v634 = vlaneseq
        %v635 = vshrl.u32 %v634, 7
        %v636 = vsub.s32 0, %v635
        %v637 = vrot.slane %v632, %v636
        %v655 = vunpack.c.l.b16 %v616
        %v656 = vunpack.c.l.b16 %v617
        %v657 = vunpack.c.l.b16 %v618
        %v658 = vunpack.c.l.b16 %v619
        %v659 = vunpack.c.l.b16 %v620
        %v660 = vunpack.c.l.b16 %v621
        %v661 = vunpack.c.l.b16 %v622
        %v662 = vunpack.c.l.b16 %v623
        %v663 = vunpack.c.l.b16 %v624
        %v664 = vunpack.c.l.b16 %v625
        %v665 = vunpack.c.l.b16 %v626
        %v666 = vunpack.c.l.b16 %v627
        %v667 = vunpack.c.l.b16 %v628
        %v668 = vunpack.c.l.b16 %v629
        %v669 = vunpack.c.l.b16 %v630
        %v670 = vunpack.c.l.b16 %v631
        %v671 = vpack.c.b16 %v656, %v655
        %v672 = vpack.c.b16 %v658, %v657
        %v673 = vpack.c.b16 %v660, %v659
        %v674 = vpack.c.b16 %v662, %v661
        %v675 = vpack.c.b16 %v664, %v663
        %v676 = vpack.c.b16 %v666, %v665
        %v677 = vpack.c.b16 %v668, %v667
        %v678 = vpack.c.b16 %v670, %v669
        %687 = vmatprep.subr.bf16.mxu0 0
        %688 = vmatpush1.bf16.msra.mxu0 %v671
        %689 = vmatprep.subr.bf16.mxu0 0
        %690 = vmatpush1.bf16.msra.mxu0 %v672
        %691 = vmatprep.subr.bf16.mxu0 0
        %692 = vmatpush1.bf16.msra.mxu0 %v673
        %693 = vmatprep.subr.bf16.mxu0 0
        %694 = vmatpush1.bf16.msra.mxu0 %v674
        %695 = vmatprep.subr.bf16.mxu0 0
        %696 = vmatpush1.bf16.msra.mxu0 %v675
        %697 = vmatprep.subr.bf16.mxu0 0
        %698 = vmatpush1.bf16.msra.mxu0 %v676
        %699 = vmatprep.subr.bf16.mxu0 0
        %700 = vmatpush1.bf16.msra.mxu0 %v677
        %701 = vmatprep.subr.bf16.mxu0 0
        %702 = vmatpush1.bf16.msra.mxu0 %v678
        %703 = vmatprep.subr.bf16.mxu0 0
        %704 = vmatpush1.bf16.msra.mxu0 0
        %705 = vmatprep.subr.bf16.mxu0 0
        %706 = vmatpush1.bf16.msra.mxu0 0
        %707 = vmatprep.subr.bf16.mxu0 0
        %708 = vmatpush1.bf16.msra.mxu0 0
        %709 = vmatprep.subr.bf16.mxu0 0
        %710 = vmatpush1.bf16.msra.mxu0 0
        %711 = vmatprep.subr.bf16.mxu0 0
        %712 = vmatpush1.bf16.msra.mxu0 0
        %713 = vmatprep.subr.bf16.mxu0 0
        %714 = vmatpush1.bf16.msra.mxu0 0
        %715 = vmatprep.subr.bf16.mxu0 0
        %716 = vmatpush1.bf16.msra.mxu0 0
        %717 = vmatprep.subr.bf16.mxu0 0
        %718 = vmatpush1.bf16.msra.mxu0 0
        %719 = vmatprep.mubr.bf16.mxu0 0
        %720 = vmatmul.mubr.bf16.gmra.mrb[0].mxu0 %v615
        %v721 = vpop.f32.mrb[0].mxu0
        %v722 = vadd.f32 %v637, %v721
        %v723 = vpop.f32.mrb[0].mxu0
        %v724 = vpop.f32.mrb[0].mxu0
        %v725 = vadd.f32 %v637, %v724
        %v726 = vpop.f32.mrb[0].mxu0
        %727 = vdwg.mxu0
        %v728 = vld [vmem:[%s567] sm:$0xf]
        %v729 = vld [vmem:[%s567 + $0x4] sm:$0xf]
        %v730 = vld [vmem:[%s567 + $0x8] sm:$0xf]
        %v731 = vld [vmem:[%s567 + $0xc] sm:$0xf]
        %v732 = vpack.c.bf16 %v722, %v722
        %v733 = vpack.c.bf16 %v725, %v725
        %735 = vrot.lane.b32.xlu0 %v732, 96
        %v736 = vpop.permute.xlu0 %735
        %vm737 = vcmask 64512
        %v739 = vsel %vm737, %v732, 0
        %v742 = vsel %vm737, %v736, 0
        %744 = vmatprep.subr.bf16.mxu0 0
        %745 = vmatpush1.bf16.xpose.msra.mxu0 %v742
        %746 = vmatprep.subr.bf16.mxu0 0
        %747 = vmatpush1.bf16.xpose.msra.mxu0 0
        %748 = vmatprep.subr.bf16.mxu0 0
        %749 = vmatpush1.bf16.xpose.msra.mxu0 0
        %750 = vmatprep.subr.bf16.mxu0 0
        %751 = vmatpush1.bf16.xpose.msra.mxu0 0
        %752 = vmatprep.subr.bf16.mxu0 0
        %753 = vmatpush1.bf16.xpose.msra.mxu0 0
        %754 = vmatprep.subr.bf16.mxu0 0
        %755 = vmatpush1.bf16.xpose.msra.mxu0 0
        %756 = vmatprep.subr.bf16.mxu0 0
        %757 = vmatpush1.bf16.xpose.msra.mxu0 0
        %758 = vmatprep.subr.bf16.mxu0 0
        %759 = vmatpush1.bf16.xpose.msra.mxu0 0
        %760 = vmatprep.subr.bf16.mxu0 0
        %761 = vmatpush1.bf16.xpose.msra.mxu0 0
        %762 = vmatprep.subr.bf16.mxu0 0
        %763 = vmatpush1.bf16.xpose.msra.mxu0 0
        %764 = vmatprep.subr.bf16.mxu0 0
        %765 = vmatpush1.bf16.xpose.msra.mxu0 0
        %766 = vmatprep.subr.bf16.mxu0 0
        %767 = vmatpush1.bf16.xpose.msra.mxu0 0
        %768 = vmatprep.subr.bf16.mxu0 0
        %769 = vmatpush1.bf16.xpose.msra.mxu0 0
        %770 = vmatprep.subr.bf16.mxu0 0
        %771 = vmatpush1.bf16.xpose.msra.mxu0 0
        %772 = vmatprep.subr.bf16.mxu0 0
        %773 = vmatpush1.bf16.xpose.msra.mxu0 0
        %774 = vmatprep.subr.bf16.mxu0 0
        %775 = vmatpush1.bf16.xpose.msra.mxu0 0
        %776 = vmatprep.mubr.bf16.mxu0 0
        %777 = vmatmul.mubr.bf16.gmra.mrb[0].mxu0 %v739
        %v778 = vpop.f32.mrb[0].mxu0
        %v779 = vadd.f32 0.0, %v778
        %v780 = vpop.f32.mrb[0].mxu0
        %v781 = vpop.f32.mrb[0].mxu0
        %v782 = vpop.f32.mrb[0].mxu0
        %783 = vdwg.mxu0
        %785 = vrot.lane.b32.xlu0 %v733, 96
        %v786 = vpop.permute.xlu0 %785
        %v788 = vsel %vm737, %v733, 0
        %v791 = vsel %vm737, %v786, 0
        %793 = vmatprep.subr.bf16.mxu0 0
        %794 = vmatpush1.bf16.xpose.msra.mxu0 %v791
        %795 = vmatprep.subr.bf16.mxu0 0
        %796 = vmatpush1.bf16.xpose.msra.mxu0 0
        %797 = vmatprep.subr.bf16.mxu0 0
        %798 = vmatpush1.bf16.xpose.msra.mxu0 0
        %799 = vmatprep.subr.bf16.mxu0 0
        %800 = vmatpush1.bf16.xpose.msra.mxu0 0
        %801 = vmatprep.subr.bf16.mxu0 0
        %802 = vmatpush1.bf16.xpose.msra.mxu0 0
        %803 = vmatprep.subr.bf16.mxu0 0
        %804 = vmatpush1.bf16.xpose.msra.mxu0 0
        %805 = vmatprep.subr.bf16.mxu0 0
        %806 = vmatpush1.bf16.xpose.msra.mxu0 0
        %807 = vmatprep.subr.bf16.mxu0 0
        %808 = vmatpush1.bf16.xpose.msra.mxu0 0
        %809 = vmatprep.subr.bf16.mxu0 0
        %810 = vmatpush1.bf16.xpose.msra.mxu0 0
        %811 = vmatprep.subr.bf16.mxu0 0
        %812 = vmatpush1.bf16.xpose.msra.mxu0 0
        %813 = vmatprep.subr.bf16.mxu0 0
        %814 = vmatpush1.bf16.xpose.msra.mxu0 0
        %815 = vmatprep.subr.bf16.mxu0 0
        %816 = vmatpush1.bf16.xpose.msra.mxu0 0
        %817 = vmatprep.subr.bf16.mxu0 0
        %818 = vmatpush1.bf16.xpose.msra.mxu0 0
        %819 = vmatprep.subr.bf16.mxu0 0
        %820 = vmatpush1.bf16.xpose.msra.mxu0 0
        %821 = vmatprep.subr.bf16.mxu0 0
        %822 = vmatpush1.bf16.xpose.msra.mxu0 0
        %823 = vmatprep.subr.bf16.mxu0 0
        %824 = vmatpush1.bf16.xpose.msra.mxu0 0
        %825 = vmatprep.mubr.bf16.mxu0 0
        %826 = vmatmul.mubr.bf16.gmra.mrb[0].mxu0 %v788
        %v827 = vpop.f32.mrb[0].mxu0
        %v828 = vadd.f32 0.0, %v827
        %v829 = vpop.f32.mrb[0].mxu0
        %v830 = vpop.f32.mrb[0].mxu0
        %v831 = vpop.f32.mrb[0].mxu0
        %832 = vdwg.mxu0
        %v833 = vmul.f32 %v779, 0.35355338
        %v834 = vmul.f32 %v828, 0.35355338
        %v835 = vsel %vm737, %v833, -inf
        %836 = vmax.xlane.f32.xlu0 %v835
        %v837 = vpop.xlane.xlu0 %836
        %v838 = vsel %vm737, %v834, -inf
        %839 = vmax.xlane.f32.xlu0 %v838
        %v840 = vpop.xlane.xlu0 %839
        %v841 = vsub.f32 %v833, %v837
        %v842 = vsub.f32 %v834, %v840
        %v843 = vmul.f32 %v841, 1.442695
        %v844 = vpow.pop %v843
        %v845 = vmul.f32 %v842, 1.442695
        %v846 = vpow.pop %v845
        %v847 = vsel %vm737, %v844, 0.0
        %848 = vadd.xlane.f32.xlu0 %v847
        %v849 = vpop.xlane.xlu0 %848
        %v850 = vsel %vm737, %v846, 0.0
        %851 = vadd.xlane.f32.xlu0 %v850
        %v852 = vpop.xlane.xlu0 %851
        %v853 = vpack.c.bf16 %v844, %v844
        %v854 = vpack.c.bf16 %v846, %v846
        %855 = vrot.lane.b32.xlu0 %v732, 64
        %v856 = vpop.permute.xlu0 %855
        %v858 = vsel %vm737, %v853, 0
        %vm860 = vcmask 1043456
        %v862 = vsel %vm860, %v856, 0
        %864 = vmatprep.subr.bf16.mxu0 0
        %865 = vmatpush1.bf16.msra.mxu0 %v862
        %866 = vmatprep.subr.bf16.mxu0 0
        %867 = vmatpush1.bf16.msra.mxu0 0
        %868 = vmatprep.subr.bf16.mxu0 0
        %869 = vmatpush1.bf16.msra.mxu0 0
        %870 = vmatprep.subr.bf16.mxu0 0
        %871 = vmatpush1.bf16.msra.mxu0 0
        %872 = vmatprep.subr.bf16.mxu0 0
        %873 = vmatpush1.bf16.msra.mxu0 0
        %874 = vmatprep.subr.bf16.mxu0 0
        %875 = vmatpush1.bf16.msra.mxu0 0
        %876 = vmatprep.subr.bf16.mxu0 0
        %877 = vmatpush1.bf16.msra.mxu0 0
        %878 = vmatprep.subr.bf16.mxu0 0
        %879 = vmatpush1.bf16.msra.mxu0 0
        %880 = vmatprep.subr.bf16.mxu0 0
        %881 = vmatpush1.bf16.msra.mxu0 0
        %882 = vmatprep.subr.bf16.mxu0 0
        %883 = vmatpush1.bf16.msra.mxu0 0
        %884 = vmatprep.subr.bf16.mxu0 0
        %885 = vmatpush1.bf16.msra.mxu0 0
        %886 = vmatprep.subr.bf16.mxu0 0
        %887 = vmatpush1.bf16.msra.mxu0 0
        %888 = vmatprep.subr.bf16.mxu0 0
        %889 = vmatpush1.bf16.msra.mxu0 0
        %890 = vmatprep.subr.bf16.mxu0 0
        %891 = vmatpush1.bf16.msra.mxu0 0
        %892 = vmatprep.subr.bf16.mxu0 0
        %893 = vmatpush1.bf16.msra.mxu0 0
        %894 = vmatprep.subr.bf16.mxu0 0
        %895 = vmatpush1.bf16.msra.mxu0 0
        %896 = vmatprep.mubr.bf16.mxu0 0
        %897 = vmatmul.mubr.bf16.gmra.mrb[0].mxu0 %v858
        %v898 = vpop.f32.mrb[0].mxu0
        %v899 = vadd.f32 0.0, %v898
        %v900 = vpop.f32.mrb[0].mxu0
        %v901 = vpop.f32.mrb[0].mxu0
        %v902 = vpop.f32.mrb[0].mxu0
        %903 = vdwg.mxu0
        %904 = vrot.lane.b32.xlu0 %v733, 64
        %v905 = vpop.permute.xlu0 %904
        %v907 = vsel %vm737, %v854, 0
        %v910 = vsel %vm860, %v905, 0
        %912 = vmatprep.subr.bf16.mxu0 0
        %913 = vmatpush1.bf16.msra.mxu0 %v910
        %914 = vmatprep.subr.bf16.mxu0 0
        %915 = vmatpush1.bf16.msra.mxu0 0
        %916 = vmatprep.subr.bf16.mxu0 0
        %917 = vmatpush1.bf16.msra.mxu0 0
        %918 = vmatprep.subr.bf16.mxu0 0
        %919 = vmatpush1.bf16.msra.mxu0 0
        %920 = vmatprep.subr.bf16.mxu0 0
        %921 = vmatpush1.bf16.msra.mxu0 0
        %922 = vmatprep.subr.bf16.mxu0 0
        %923 = vmatpush1.bf16.msra.mxu0 0
        %924 = vmatprep.subr.bf16.mxu0 0
        %925 = vmatpush1.bf16.msra.mxu0 0
        %926 = vmatprep.subr.bf16.mxu0 0
        %927 = vmatpush1.bf16.msra.mxu0 0
        %928 = vmatprep.subr.bf16.mxu0 0
        %929 = vmatpush1.bf16.msra.mxu0 0
        %930 = vmatprep.subr.bf16.mxu0 0
        %931 = vmatpush1.bf16.msra.mxu0 0
        %932 = vmatprep.subr.bf16.mxu0 0
        %933 = vmatpush1.bf16.msra.mxu0 0
        %934 = vmatprep.subr.bf16.mxu0 0
        %935 = vmatpush1.bf16.msra.mxu0 0
        %936 = vmatprep.subr.bf16.mxu0 0
        %937 = vmatpush1.bf16.msra.mxu0 0
        %938 = vmatprep.subr.bf16.mxu0 0
        %939 = vmatpush1.bf16.msra.mxu0 0
        %940 = vmatprep.subr.bf16.mxu0 0
        %941 = vmatpush1.bf16.msra.mxu0 0
        %942 = vmatprep.subr.bf16.mxu0 0
        %943 = vmatpush1.bf16.msra.mxu0 0
        %944 = vmatprep.mubr.bf16.mxu0 0
        %945 = vmatmul.mubr.bf16.gmra.mrb[0].mxu0 %v907
        %v946 = vpop.f32.mrb[0].mxu0
        %v947 = vadd.f32 0.0, %v946
        %v948 = vpop.f32.mrb[0].mxu0
        %v949 = vpop.f32.mrb[0].mxu0
        %v950 = vpop.f32.mrb[0].mxu0
        %951 = vdwg.mxu0
        %v952 = vrcp.pop %v849
        %v953 = vrcp.pop %v852
        %v954 = vmul.f32 %v899, %v952
        %v955 = vmul.f32 %v947, %v953
        %v956 = vpack.c.bf16 %v955, %v954
        %957 = vrot.lane.b32.xlu0 %v732, 120
        %v958 = vpop.permute.xlu0 %957
        %959 = vrot.lane.b32.xlu0 %v732, 88
        %v960 = vpop.permute.xlu0 %959
        %v962 = vsel %vm737, %v958, 0
        %v965 = vsel %vm737, %v960, 0
        %967 = vmatprep.subr.bf16.mxu0 0
        %968 = vmatpush1.bf16.xpose.msra.mxu0 %v965
        %969 = vmatprep.subr.bf16.mxu0 0
        %970 = vmatpush1.bf16.xpose.msra.mxu0 0
        %971 = vmatprep.subr.bf16.mxu0 0
        %972 = vmatpush1.bf16.xpose.msra.mxu0 0
        %973 = vmatprep.subr.bf16.mxu0 0
        %974 = vmatpush1.bf16.xpose.msra.mxu0 0
        %975 = vmatprep.subr.bf16.mxu0 0
        %976 = vmatpush1.bf16.xpose.msra.mxu0 0
        %977 = vmatprep.subr.bf16.mxu0 0
        %978 = vmatpush1.bf16.xpose.msra.mxu0 0
        %979 = vmatprep.subr.bf16.mxu0 0
        %980 = vmatpush1.bf16.xpose.msra.mxu0 0
        %981 = vmatprep.subr.bf16.mxu0 0
        %982 = vmatpush1.bf16.xpose.msra.mxu0 0
        %983 = vmatprep.subr.bf16.mxu0 0
        %984 = vmatpush1.bf16.xpose.msra.mxu0 0
        %985 = vmatprep.subr.bf16.mxu0 0
        %986 = vmatpush1.bf16.xpose.msra.mxu0 0
        %987 = vmatprep.subr.bf16.mxu0 0
        %988 = vmatpush1.bf16.xpose.msra.mxu0 0
        %989 = vmatprep.subr.bf16.mxu0 0
        %990 = vmatpush1.bf16.xpose.msra.mxu0 0
        %991 = vmatprep.subr.bf16.mxu0 0
        %992 = vmatpush1.bf16.xpose.msra.mxu0 0
        %993 = vmatprep.subr.bf16.mxu0 0
        %994 = vmatpush1.bf16.xpose.msra.mxu0 0
        %995 = vmatprep.subr.bf16.mxu0 0
        %996 = vmatpush1.bf16.xpose.msra.mxu0 0
        %997 = vmatprep.subr.bf16.mxu0 0
        %998 = vmatpush1.bf16.xpose.msra.mxu0 0
        %999 = vmatprep.mubr.bf16.mxu0 0
        %1000 = vmatmul.mubr.bf16.gmra.mrb[0].mxu0 %v962
        %v1001 = vpop.f32.mrb[0].mxu0
        %v1002 = vadd.f32 0.0, %v1001
        %v1003 = vpop.f32.mrb[0].mxu0
        %v1004 = vpop.f32.mrb[0].mxu0
        %v1005 = vpop.f32.mrb[0].mxu0
        %1006 = vdwg.mxu0
        %1007 = vrot.lane.b32.xlu0 %v733, 120
        %v1008 = vpop.permute.xlu0 %1007
        %1009 = vrot.lane.b32.xlu0 %v733, 88
        %v1010 = vpop.permute.xlu0 %1009
        %v1012 = vsel %vm737, %v1008, 0
        %v1015 = vsel %vm737, %v1010, 0
        %1017 = vmatprep.subr.bf16.mxu0 0
        %1018 = vmatpush1.bf16.xpose.msra.mxu0 %v1015
        %1019 = vmatprep.subr.bf16.mxu0 0
        %1020 = vmatpush1.bf16.xpose.msra.mxu0 0
        %1021 = vmatprep.subr.bf16.mxu0 0
        %1022 = vmatpush1.bf16.xpose.msra.mxu0 0
        %1023 = vmatprep.subr.bf16.mxu0 0
        %1024 = vmatpush1.bf16.xpose.msra.mxu0 0
        %1025 = vmatprep.subr.bf16.mxu0 0
        %1026 = vmatpush1.bf16.xpose.msra.mxu0 0
        %1027 = vmatprep.subr.bf16.mxu0 0
        %1028 = vmatpush1.bf16.xpose.msra.mxu0 0
        %1029 = vmatprep.subr.bf16.mxu0 0
        %1030 = vmatpush1.bf16.xpose.msra.mxu0 0
        %1031 = vmatprep.subr.bf16.mxu0 0
        %1032 = vmatpush1.bf16.xpose.msra.mxu0 0
        %1033 = vmatprep.subr.bf16.mxu0 0
        %1034 = vmatpush1.bf16.xpose.msra.mxu0 0
        %1035 = vmatprep.subr.bf16.mxu0 0
        %1036 = vmatpush1.bf16.xpose.msra.mxu0 0
        %1037 = vmatprep.subr.bf16.mxu0 0
        %1038 = vmatpush1.bf16.xpose.msra.mxu0 0
        %1039 = vmatprep.subr.bf16.mxu0 0
        %1040 = vmatpush1.bf16.xpose.msra.mxu0 0
        %1041 = vmatprep.subr.bf16.mxu0 0
        %1042 = vmatpush1.bf16.xpose.msra.mxu0 0
        %1043 = vmatprep.subr.bf16.mxu0 0
        %1044 = vmatpush1.bf16.xpose.msra.mxu0 0
        %1045 = vmatprep.subr.bf16.mxu0 0
        %1046 = vmatpush1.bf16.xpose.msra.mxu0 0
        %1047 = vmatprep.subr.bf16.mxu0 0
        %1048 = vmatpush1.bf16.xpose.msra.mxu0 0
        %1049 = vmatprep.mubr.bf16.mxu0 0
        %1050 = vmatmul.mubr.bf16.gmra.mrb[0].mxu0 %v1012
        %v1051 = vpop.f32.mrb[0].mxu0
        %v1052 = vadd.f32 0.0, %v1051
        %v1053 = vpop.f32.mrb[0].mxu0
        %v1054 = vpop.f32.mrb[0].mxu0
        %v1055 = vpop.f32.mrb[0].mxu0
        %1056 = vdwg.mxu0
        %v1057 = vmul.f32 %v1002, 0.35355338
        %v1058 = vmul.f32 %v1052, 0.35355338
        %v1059 = vsel %vm737, %v1057, -inf
        %1060 = vmax.xlane.f32.xlu0 %v1059
        %v1061 = vpop.xlane.xlu0 %1060
        %v1062 = vsel %vm737, %v1058, -inf
        %1063 = vmax.xlane.f32.xlu0 %v1062
        %v1064 = vpop.xlane.xlu0 %1063
        %v1065 = vsub.f32 %v1057, %v1061
        %v1066 = vsub.f32 %v1058, %v1064
        %v1067 = vmul.f32 %v1065, 1.442695
        %v1068 = vpow.pop %v1067
        %v1069 = vmul.f32 %v1066, 1.442695
        %v1070 = vpow.pop %v1069
        %v1071 = vsel %vm737, %v1068, 0.0
        %1072 = vadd.xlane.f32.xlu0 %v1071
        %v1073 = vpop.xlane.xlu0 %1072
        %v1074 = vsel %vm737, %v1070, 0.0
        %1075 = vadd.xlane.f32.xlu0 %v1074
        %v1076 = vpop.xlane.xlu0 %1075
        %v1077 = vpack.c.bf16 %v1068, %v1068
        %v1078 = vpack.c.bf16 %v1070, %v1070
        %1079 = vrot.lane.b32.xlu0 %v732, 56
        %v1080 = vpop.permute.xlu0 %1079
        %v1082 = vsel %vm737, %v1077, 0
        %v1085 = vsel %vm860, %v1080, 0
        %1087 = vmatprep.subr.bf16.mxu0 0
        %1088 = vmatpush1.bf16.msra.mxu0 %v1085
        %1089 = vmatprep.subr.bf16.mxu0 0
        %1090 = vmatpush1.bf16.msra.mxu0 0
        %1091 = vmatprep.subr.bf16.mxu0 0
        %1092 = vmatpush1.bf16.msra.mxu0 0
        %1093 = vmatprep.subr.bf16.mxu0 0
        %1094 = vmatpush1.bf16.msra.mxu0 0
        %1095 = vmatprep.subr.bf16.mxu0 0
        %1096 = vmatpush1.bf16.msra.mxu0 0
        %1097 = vmatprep.subr.bf16.mxu0 0
        %1098 = vmatpush1.bf16.msra.mxu0 0
        %1099 = vmatprep.subr.bf16.mxu0 0
        %1100 = vmatpush1.bf16.msra.mxu0 0
        %1101 = vmatprep.subr.bf16.mxu0 0
        %1102 = vmatpush1.bf16.msra.mxu0 0
        %1103 = vmatprep.subr.bf16.mxu0 0
        %1104 = vmatpush1.bf16.msra.mxu0 0
        %1105 = vmatprep.subr.bf16.mxu0 0
        %1106 = vmatpush1.bf16.msra.mxu0 0
        %1107 = vmatprep.subr.bf16.mxu0 0
        %1108 = vmatpush1.bf16.msra.mxu0 0
        %1109 = vmatprep.subr.bf16.mxu0 0
        %1110 = vmatpush1.bf16.msra.mxu0 0
        %1111 = vmatprep.subr.bf16.mxu0 0
        %1112 = vmatpush1.bf16.msra.mxu0 0
        %1113 = vmatprep.subr.bf16.mxu0 0
        %1114 = vmatpush1.bf16.msra.mxu0 0
        %1115 = vmatprep.subr.bf16.mxu0 0
        %1116 = vmatpush1.bf16.msra.mxu0 0
        %1117 = vmatprep.subr.bf16.mxu0 0
        %1118 = vmatpush1.bf16.msra.mxu0 0
        %1119 = vmatprep.mubr.bf16.mxu0 0
        %1120 = vmatmul.mubr.bf16.gmra.mrb[0].mxu0 %v1082
        %v1121 = vpop.f32.mrb[0].mxu0
        %v1122 = vadd.f32 0.0, %v1121
        %v1123 = vpop.f32.mrb[0].mxu0
        %v1124 = vpop.f32.mrb[0].mxu0
        %v1125 = vpop.f32.mrb[0].mxu0
        %1126 = vdwg.mxu0
        %1127 = vrot.lane.b32.xlu0 %v733, 56
        %v1128 = vpop.permute.xlu0 %1127
        %v1130 = vsel %vm737, %v1078, 0
        %v1133 = vsel %vm860, %v1128, 0
        %1135 = vmatprep.subr.bf16.mxu0 0
        %1136 = vmatpush1.bf16.msra.mxu0 %v1133
        %1137 = vmatprep.subr.bf16.mxu0 0
        %1138 = vmatpush1.bf16.msra.mxu0 0
        %1139 = vmatprep.subr.bf16.mxu0 0
        %1140 = vmatpush1.bf16.msra.mxu0 0
        %1141 = vmatprep.subr.bf16.mxu0 0
        %1142 = vmatpush1.bf16.msra.mxu0 0
        %1143 = vmatprep.subr.bf16.mxu0 0
        %1144 = vmatpush1.bf16.msra.mxu0 0
        %1145 = vmatprep.subr.bf16.mxu0 0
        %1146 = vmatpush1.bf16.msra.mxu0 0
        %1147 = vmatprep.subr.bf16.mxu0 0
        %1148 = vmatpush1.bf16.msra.mxu0 0
        %1149 = vmatprep.subr.bf16.mxu0 0
        %1150 = vmatpush1.bf16.msra.mxu0 0
        %1151 = vmatprep.subr.bf16.mxu0 0
        %1152 = vmatpush1.bf16.msra.mxu0 0
        %1153 = vmatprep.subr.bf16.mxu0 0
        %1154 = vmatpush1.bf16.msra.mxu0 0
        %1155 = vmatprep.subr.bf16.mxu0 0
        %1156 = vmatpush1.bf16.msra.mxu0 0
        %1157 = vmatprep.subr.bf16.mxu0 0
        %1158 = vmatpush1.bf16.msra.mxu0 0
        %1159 = vmatprep.subr.bf16.mxu0 0
        %1160 = vmatpush1.bf16.msra.mxu0 0
        %1161 = vmatprep.subr.bf16.mxu0 0
        %1162 = vmatpush1.bf16.msra.mxu0 0
        %1163 = vmatprep.subr.bf16.mxu0 0
        %1164 = vmatpush1.bf16.msra.mxu0 0
        %1165 = vmatprep.subr.bf16.mxu0 0
        %1166 = vmatpush1.bf16.msra.mxu0 0
        %1167 = vmatprep.mubr.bf16.mxu0 0
        %1168 = vmatmul.mubr.bf16.gmra.mrb[0].mxu0 %v1130
        %v1169 = vpop.f32.mrb[0].mxu0
        %v1170 = vadd.f32 0.0, %v1169
        %v1171 = vpop.f32.mrb[0].mxu0
        %v1172 = vpop.f32.mrb[0].mxu0
        %v1173 = vpop.f32.mrb[0].mxu0
        %1174 = vdwg.mxu0
        %v1175 = vrcp.pop %v1073
        %v1176 = vrcp.pop %v1076
        %v1177 = vmul.f32 %v1122, %v1175
        %v1178 = vmul.f32 %v1170, %v1176
        %v1179 = vpack.c.bf16 %v1178, %v1177
        %v1181 = vsel %vm737, %v1179, 0
        %v1184 = vsel %vm860, %v729, 0
        %1186 = vmatprep.subr.bf16.mxu0 0
        %1187 = vmatpush1.bf16.msra.mxu0 %v1184
        %1188 = vmatprep.subr.bf16.mxu0 0
        %1189 = vmatpush1.bf16.msra.mxu0 0
        %1190 = vmatprep.subr.bf16.mxu0 0
        %1191 = vmatpush1.bf16.msra.mxu0 0
        %1192 = vmatprep.subr.bf16.mxu0 0
        %1193 = vmatpush1.bf16.msra.mxu0 0
        %1194 = vmatprep.subr.bf16.mxu0 0
        %1195 = vmatpush1.bf16.msra.mxu0 0
        %1196 = vmatprep.subr.bf16.mxu0 0
        %1197 = vmatpush1.bf16.msra.mxu0 0
        %1198 = vmatprep.subr.bf16.mxu0 0
        %1199 = vmatpush1.bf16.msra.mxu0 0
        %1200 = vmatprep.subr.bf16.mxu0 0
        %1201 = vmatpush1.bf16.msra.mxu0 0
        %1202 = vmatprep.subr.bf16.mxu0 0
        %1203 = vmatpush1.bf16.msra.mxu0 0
        %1204 = vmatprep.subr.bf16.mxu0 0
        %1205 = vmatpush1.bf16.msra.mxu0 0
        %1206 = vmatprep.subr.bf16.mxu0 0
        %1207 = vmatpush1.bf16.msra.mxu0 0
        %1208 = vmatprep.subr.bf16.mxu0 0
        %1209 = vmatpush1.bf16.msra.mxu0 0
        %1210 = vmatprep.subr.bf16.mxu0 0
        %1211 = vmatpush1.bf16.msra.mxu0 0
        %1212 = vmatprep.subr.bf16.mxu0 0
        %1213 = vmatpush1.bf16.msra.mxu0 0
        %1214 = vmatprep.subr.bf16.mxu0 0
        %1215 = vmatpush1.bf16.msra.mxu0 0
        %1216 = vmatprep.subr.bf16.mxu0 0
        %1217 = vmatpush1.bf16.msra.mxu0 0
        %1218 = vmatprep.mubr.bf16.mxu0 0
        %1219 = vmatmul.mubr.bf16.gmra.mrb[0].mxu0 %v1181
        %v1220 = vpop.f32.mrb[0].mxu0
        %v1221 = vadd.f32 0.0, %v1220
        %v1222 = vpop.f32.mrb[0].mxu0
        %v1223 = vpop.f32.mrb[0].mxu0
        %v1224 = vadd.f32 0.0, %v1223
        %v1225 = vpop.f32.mrb[0].mxu0
        %1226 = vdwg.mxu0
        %v1228 = vsel %vm737, %v956, 0
        %v1231 = vsel %vm860, %v728, 0
        %1233 = vmatprep.subr.bf16.mxu0 0
        %1234 = vmatpush1.bf16.msra.mxu0 %v1231
        %1235 = vmatprep.subr.bf16.mxu0 0
        %1236 = vmatpush1.bf16.msra.mxu0 0
        %1237 = vmatprep.subr.bf16.mxu0 0
        %1238 = vmatpush1.bf16.msra.mxu0 0
        %1239 = vmatprep.subr.bf16.mxu0 0
        %1240 = vmatpush1.bf16.msra.mxu0 0
        %1241 = vmatprep.subr.bf16.mxu0 0
        %1242 = vmatpush1.bf16.msra.mxu0 0
        %1243 = vmatprep.subr.bf16.mxu0 0
        %1244 = vmatpush1.bf16.msra.mxu0 0
        %1245 = vmatprep.subr.bf16.mxu0 0
        %1246 = vmatpush1.bf16.msra.mxu0 0
        %1247 = vmatprep.subr.bf16.mxu0 0
        %1248 = vmatpush1.bf16.msra.mxu0 0
        %1249 = vmatprep.subr.bf16.mxu0 0
        %1250 = vmatpush1.bf16.msra.mxu0 0
        %1251 = vmatprep.subr.bf16.mxu0 0
        %1252 = vmatpush1.bf16.msra.mxu0 0
        %1253 = vmatprep.subr.bf16.mxu0 0
        %1254 = vmatpush1.bf16.msra.mxu0 0
        %1255 = vmatprep.subr.bf16.mxu0 0
        %1256 = vmatpush1.bf16.msra.mxu0 0
        %1257 = vmatprep.subr.bf16.mxu0 0
        %1258 = vmatpush1.bf16.msra.mxu0 0
        %1259 = vmatprep.subr.bf16.mxu0 0
        %1260 = vmatpush1.bf16.msra.mxu0 0
        %1261 = vmatprep.subr.bf16.mxu0 0
        %1262 = vmatpush1.bf16.msra.mxu0 0
        %1263 = vmatprep.subr.bf16.mxu0 0
        %1264 = vmatpush1.bf16.msra.mxu0 0
        %1265 = vmatprep.mubr.bf16.mxu0 0
        %1266 = vmatmul.mubr.bf16.gmra.mrb[0].mxu0 %v1228
        %v1267 = vpop.f32.mrb[0].mxu0
        %v1268 = vadd.f32 %v1221, %v1267
        %v1269 = vpop.f32.mrb[0].mxu0
        %v1270 = vpop.f32.mrb[0].mxu0
        %v1271 = vadd.f32 %v1224, %v1270
        %v1272 = vpop.f32.mrb[0].mxu0
        %1273 = vdwg.mxu0
        %1274 = vrot.lane.b32.xlu0 %v732, 112
        %v1275 = vpop.permute.xlu0 %1274
        %1276 = vrot.lane.b32.xlu0 %v732, 80
        %v1277 = vpop.permute.xlu0 %1276
        %v1279 = vsel %vm737, %v1275, 0
        %v1282 = vsel %vm737, %v1277, 0
        %1284 = vmatprep.subr.bf16.mxu0 0
        %1285 = vmatpush1.bf16.xpose.msra.mxu0 %v1282
        %1286 = vmatprep.subr.bf16.mxu0 0
        %1287 = vmatpush1.bf16.xpose.msra.mxu0 0
        %1288 = vmatprep.subr.bf16.mxu0 0
        %1289 = vmatpush1.bf16.xpose.msra.mxu0 0
        %1290 = vmatprep.subr.bf16.mxu0 0
        %1291 = vmatpush1.bf16.xpose.msra.mxu0 0
        %1292 = vmatprep.subr.bf16.mxu0 0
        %1293 = vmatpush1.bf16.xpose.msra.mxu0 0
        %1294 = vmatprep.subr.bf16.mxu0 0
        %1295 = vmatpush1.bf16.xpose.msra.mxu0 0
        %1296 = vmatprep.subr.bf16.mxu0 0
        %1297 = vmatpush1.bf16.xpose.msra.mxu0 0
        %1298 = vmatprep.subr.bf16.mxu0 0
        %1299 = vmatpush1.bf16.xpose.msra.mxu0 0
        %1300 = vmatprep.subr.bf16.mxu0 0
        %1301 = vmatpush1.bf16.xpose.msra.mxu0 0
        %1302 = vmatprep.subr.bf16.mxu0 0
        %1303 = vmatpush1.bf16.xpose.msra.mxu0 0
        %1304 = vmatprep.subr.bf16.mxu0 0
        %1305 = vmatpush1.bf16.xpose.msra.mxu0 0
        %1306 = vmatprep.subr.bf16.mxu0 0
        %1307 = vmatpush1.bf16.xpose.msra.mxu0 0
        %1308 = vmatprep.subr.bf16.mxu0 0
        %1309 = vmatpush1.bf16.xpose.msra.mxu0 0
        %1310 = vmatprep.subr.bf16.mxu0 0
        %1311 = vmatpush1.bf16.xpose.msra.mxu0 0
        %1312 = vmatprep.subr.bf16.mxu0 0
        %1313 = vmatpush1.bf16.xpose.msra.mxu0 0
        %1314 = vmatprep.subr.bf16.mxu0 0
        %1315 = vmatpush1.bf16.xpose.msra.mxu0 0
        %1316 = vmatprep.mubr.bf16.mxu0 0
        %1317 = vmatmul.mubr.bf16.gmra.mrb[0].mxu0 %v1279
        %v1318 = vpop.f32.mrb[0].mxu0
        %v1319 = vadd.f32 0.0, %v1318
        %v1320 = vpop.f32.mrb[0].mxu0
        %v1321 = vpop.f32.mrb[0].mxu0
        %v1322 = vpop.f32.mrb[0].mxu0
        %1323 = vdwg.mxu0
        %1324 = vrot.lane.b32.xlu0 %v733, 112
        %v1325 = vpop.permute.xlu0 %1324
        %1326 = vrot.lane.b32.xlu0 %v733, 80
        %v1327 = vpop.permute.xlu0 %1326
        %v1329 = vsel %vm737, %v1325, 0
        %v1332 = vsel %vm737, %v1327, 0
        %1334 = vmatprep.subr.bf16.mxu0 0
        %1335 = vmatpush1.bf16.xpose.msra.mxu0 %v1332
        %1336 = vmatprep.subr.bf16.mxu0 0
        %1337 = vmatpush1.bf16.xpose.msra.mxu0 0
        %1338 = vmatprep.subr.bf16.mxu0 0
        %1339 = vmatpush1.bf16.xpose.msra.mxu0 0
        %1340 = vmatprep.subr.bf16.mxu0 0
        %1341 = vmatpush1.bf16.xpose.msra.mxu0 0
        %1342 = vmatprep.subr.bf16.mxu0 0
        %1343 = vmatpush1.bf16.xpose.msra.mxu0 0
        %1344 = vmatprep.subr.bf16.mxu0 0
        %1345 = vmatpush1.bf16.xpose.msra.mxu0 0
        %1346 = vmatprep.subr.bf16.mxu0 0
        %1347 = vmatpush1.bf16.xpose.msra.mxu0 0
        %1348 = vmatprep.subr.bf16.mxu0 0
        %1349 = vmatpush1.bf16.xpose.msra.mxu0 0
        %1350 = vmatprep.subr.bf16.mxu0 0
        %1351 = vmatpush1.bf16.xpose.msra.mxu0 0
        %1352 = vmatprep.subr.bf16.mxu0 0
        %1353 = vmatpush1.bf16.xpose.msra.mxu0 0
        %1354 = vmatprep.subr.bf16.mxu0 0
        %1355 = vmatpush1.bf16.xpose.msra.mxu0 0
        %1356 = vmatprep.subr.bf16.mxu0 0
        %1357 = vmatpush1.bf16.xpose.msra.mxu0 0
        %1358 = vmatprep.subr.bf16.mxu0 0
        %1359 = vmatpush1.bf16.xpose.msra.mxu0 0
        %1360 = vmatprep.subr.bf16.mxu0 0
        %1361 = vmatpush1.bf16.xpose.msra.mxu0 0
        %1362 = vmatprep.subr.bf16.mxu0 0
        %1363 = vmatpush1.bf16.xpose.msra.mxu0 0
        %1364 = vmatprep.subr.bf16.mxu0 0
        %1365 = vmatpush1.bf16.xpose.msra.mxu0 0
        %1366 = vmatprep.mubr.bf16.mxu0 0
        %1367 = vmatmul.mubr.bf16.gmra.mrb[0].mxu0 %v1329
        %v1368 = vpop.f32.mrb[0].mxu0
        %v1369 = vadd.f32 0.0, %v1368
        %v1370 = vpop.f32.mrb[0].mxu0
        %v1371 = vpop.f32.mrb[0].mxu0
        %v1372 = vpop.f32.mrb[0].mxu0
        %1373 = vdwg.mxu0
        %v1374 = vmul.f32 %v1319, 0.35355338
        %v1375 = vmul.f32 %v1369, 0.35355338
        %v1376 = vsel %vm737, %v1374, -inf
        %1377 = vmax.xlane.f32.xlu0 %v1376
        %v1378 = vpop.xlane.xlu0 %1377
        %v1379 = vsel %vm737, %v1375, -inf
        %1380 = vmax.xlane.f32.xlu0 %v1379
        %v1381 = vpop.xlane.xlu0 %1380
        %v1382 = vsub.f32 %v1374, %v1378
        %v1383 = vsub.f32 %v1375, %v1381
        %v1384 = vmul.f32 %v1382, 1.442695
        %v1385 = vpow.pop %v1384
        %v1386 = vmul.f32 %v1383, 1.442695
        %v1387 = vpow.pop %v1386
        %v1388 = vsel %vm737, %v1385, 0.0
        %1389 = vadd.xlane.f32.xlu0 %v1388
        %v1390 = vpop.xlane.xlu0 %1389
        %v1391 = vsel %vm737, %v1387, 0.0
        %1392 = vadd.xlane.f32.xlu0 %v1391
        %v1393 = vpop.xlane.xlu0 %1392
        %v1394 = vpack.c.bf16 %v1385, %v1385
        %v1395 = vpack.c.bf16 %v1387, %v1387
        %1396 = vrot.lane.b32.xlu0 %v732, 48
        %v1397 = vpop.permute.xlu0 %1396
        %v1399 = vsel %vm737, %v1394, 0
        %v1402 = vsel %vm860, %v1397, 0
        %1404 = vmatprep.subr.bf16.mxu0 0
        %1405 = vmatpush1.bf16.msra.mxu0 %v1402
        %1406 = vmatprep.subr.bf16.mxu0 0
        %1407 = vmatpush1.bf16.msra.mxu0 0
        %1408 = vmatprep.subr.bf16.mxu0 0
        %1409 = vmatpush1.bf16.msra.mxu0 0
        %1410 = vmatprep.subr.bf16.mxu0 0
        %1411 = vmatpush1.bf16.msra.mxu0 0
        %1412 = vmatprep.subr.bf16.mxu0 0
        %1413 = vmatpush1.bf16.msra.mxu0 0
        %1414 = vmatprep.subr.bf16.mxu0 0
        %1415 = vmatpush1.bf16.msra.mxu0 0
        %1416 = vmatprep.subr.bf16.mxu0 0
        %1417 = vmatpush1.bf16.msra.mxu0 0
        %1418 = vmatprep.subr.bf16.mxu0 0
        %1419 = vmatpush1.bf16.msra.mxu0 0
        %1420 = vmatprep.subr.bf16.mxu0 0
        %1421 = vmatpush1.bf16.msra.mxu0 0
        %1422 = vmatprep.subr.bf16.mxu0 0
        %1423 = vmatpush1.bf16.msra.mxu0 0
        %1424 = vmatprep.subr.bf16.mxu0 0
        %1425 = vmatpush1.bf16.msra.mxu0 0
        %1426 = vmatprep.subr.bf16.mxu0 0
        %1427 = vmatpush1.bf16.msra.mxu0 0
        %1428 = vmatprep.subr.bf16.mxu0 0
        %1429 = vmatpush1.bf16.msra.mxu0 0
        %1430 = vmatprep.subr.bf16.mxu0 0
        %1431 = vmatpush1.bf16.msra.mxu0 0
        %1432 = vmatprep.subr.bf16.mxu0 0
        %1433 = vmatpush1.bf16.msra.mxu0 0
        %1434 = vmatprep.subr.bf16.mxu0 0
        %1435 = vmatpush1.bf16.msra.mxu0 0
        %1436 = vmatprep.mubr.bf16.mxu0 0
        %1437 = vmatmul.mubr.bf16.gmra.mrb[0].mxu0 %v1399
        %v1438 = vpop.f32.mrb[0].mxu0
        %v1439 = vadd.f32 0.0, %v1438
        %v1440 = vpop.f32.mrb[0].mxu0
        %v1441 = vpop.f32.mrb[0].mxu0
        %v1442 = vpop.f32.mrb[0].mxu0
        %1443 = vdwg.mxu0
        %1444 = vrot.lane.b32.xlu0 %v733, 48
        %v1445 = vpop.permute.xlu0 %1444
        %v1447 = vsel %vm737, %v1395, 0
        %v1450 = vsel %vm860, %v1445, 0
        %1452 = vmatprep.subr.bf16.mxu0 0
        %1453 = vmatpush1.bf16.msra.mxu0 %v1450
        %1454 = vmatprep.subr.bf16.mxu0 0
        %1455 = vmatpush1.bf16.msra.mxu0 0
        %1456 = vmatprep.subr.bf16.mxu0 0
        %1457 = vmatpush1.bf16.msra.mxu0 0
        %1458 = vmatprep.subr.bf16.mxu0 0
        %1459 = vmatpush1.bf16.msra.mxu0 0
        %1460 = vmatprep.subr.bf16.mxu0 0
        %1461 = vmatpush1.bf16.msra.mxu0 0
        %1462 = vmatprep.subr.bf16.mxu0 0
        %1463 = vmatpush1.bf16.msra.mxu0 0
        %1464 = vmatprep.subr.bf16.mxu0 0
        %1465 = vmatpush1.bf16.msra.mxu0 0
        %1466 = vmatprep.subr.bf16.mxu0 0
        %1467 = vmatpush1.bf16.msra.mxu0 0
        %1468 = vmatprep.subr.bf16.mxu0 0
        %1469 = vmatpush1.bf16.msra.mxu0 0
        %1470 = vmatprep.subr.bf16.mxu0 0
        %1471 = vmatpush1.bf16.msra.mxu0 0
        %1472 = vmatprep.subr.bf16.mxu0 0
        %1473 = vmatpush1.bf16.msra.mxu0 0
        %1474 = vmatprep.subr.bf16.mxu0 0
        %1475 = vmatpush1.bf16.msra.mxu0 0
        %1476 = vmatprep.subr.bf16.mxu0 0
        %1477 = vmatpush1.bf16.msra.mxu0 0
        %1478 = vmatprep.subr.bf16.mxu0 0
        %1479 = vmatpush1.bf16.msra.mxu0 0
        %1480 = vmatprep.subr.bf16.mxu0 0
        %1481 = vmatpush1.bf16.msra.mxu0 0
        %1482 = vmatprep.subr.bf16.mxu0 0
        %1483 = vmatpush1.bf16.msra.mxu0 0
        %1484 = vmatprep.mubr.bf16.mxu0 0
        %1485 = vmatmul.mubr.bf16.gmra.mrb[0].mxu0 %v1447
        %v1486 = vpop.f32.mrb[0].mxu0
        %v1487 = vadd.f32 0.0, %v1486
        %v1488 = vpop.f32.mrb[0].mxu0
        %v1489 = vpop.f32.mrb[0].mxu0
        %v1490 = vpop.f32.mrb[0].mxu0
        %1491 = vdwg.mxu0
        %v1492 = vrcp.pop %v1390
        %v1493 = vrcp.pop %v1393
        %v1494 = vmul.f32 %v1439, %v1492
        %v1495 = vmul.f32 %v1487, %v1493
        %v1496 = vpack.c.bf16 %v1495, %v1494
        %v1498 = vsel %vm737, %v1496, 0
        %v1501 = vsel %vm860, %v730, 0
        %1503 = vmatprep.subr.bf16.mxu0 0
        %1504 = vmatpush1.bf16.msra.mxu0 %v1501
        %1505 = vmatprep.subr.bf16.mxu0 0
        %1506 = vmatpush1.bf16.msra.mxu0 0
        %1507 = vmatprep.subr.bf16.mxu0 0
        %1508 = vmatpush1.bf16.msra.mxu0 0
        %1509 = vmatprep.subr.bf16.mxu0 0
        %1510 = vmatpush1.bf16.msra.mxu0 0
        %1511 = vmatprep.subr.bf16.mxu0 0
        %1512 = vmatpush1.bf16.msra.mxu0 0
        %1513 = vmatprep.subr.bf16.mxu0 0
        %1514 = vmatpush1.bf16.msra.mxu0 0
        %1515 = vmatprep.subr.bf16.mxu0 0
        %1516 = vmatpush1.bf16.msra.mxu0 0
        %1517 = vmatprep.subr.bf16.mxu0 0
        %1518 = vmatpush1.bf16.msra.mxu0 0
        %1519 = vmatprep.subr.bf16.mxu0 0
        %1520 = vmatpush1.bf16.msra.mxu0 0
        %1521 = vmatprep.subr.bf16.mxu0 0
        %1522 = vmatpush1.bf16.msra.mxu0 0
        %1523 = vmatprep.subr.bf16.mxu0 0
        %1524 = vmatpush1.bf16.msra.mxu0 0
        %1525 = vmatprep.subr.bf16.mxu0 0
        %1526 = vmatpush1.bf16.msra.mxu0 0
        %1527 = vmatprep.subr.bf16.mxu0 0
        %1528 = vmatpush1.bf16.msra.mxu0 0
        %1529 = vmatprep.subr.bf16.mxu0 0
        %1530 = vmatpush1.bf16.msra.mxu0 0
        %1531 = vmatprep.subr.bf16.mxu0 0
        %1532 = vmatpush1.bf16.msra.mxu0 0
        %1533 = vmatprep.subr.bf16.mxu0 0
        %1534 = vmatpush1.bf16.msra.mxu0 0
        %1535 = vmatprep.mubr.bf16.mxu0 0
        %1536 = vmatmul.mubr.bf16.gmra.mrb[0].mxu0 %v1498
        %v1537 = vpop.f32.mrb[0].mxu0
        %v1538 = vadd.f32 0.0, %v1537
        %v1539 = vpop.f32.mrb[0].mxu0
        %v1540 = vpop.f32.mrb[0].mxu0
        %v1541 = vadd.f32 0.0, %v1540
        %v1542 = vpop.f32.mrb[0].mxu0
        %1543 = vdwg.mxu0
        %v1544 = vadd.f32 %v1268, %v1538
        %v1545 = vadd.f32 %v1271, %v1541
        %1546 = vrot.lane.b32.xlu0 %v732, 104
        %v1547 = vpop.permute.xlu0 %1546
        %1548 = vrot.lane.b32.xlu0 %v732, 72
        %v1549 = vpop.permute.xlu0 %1548
        %v1551 = vsel %vm737, %v1547, 0
        %v1554 = vsel %vm737, %v1549, 0
        %1556 = vmatprep.subr.bf16.mxu0 0
        %1557 = vmatpush1.bf16.xpose.msra.mxu0 %v1554
        %1558 = vmatprep.subr.bf16.mxu0 0
        %1559 = vmatpush1.bf16.xpose.msra.mxu0 0
        %1560 = vmatprep.subr.bf16.mxu0 0
        %1561 = vmatpush1.bf16.xpose.msra.mxu0 0
        %1562 = vmatprep.subr.bf16.mxu0 0
        %1563 = vmatpush1.bf16.xpose.msra.mxu0 0
        %1564 = vmatprep.subr.bf16.mxu0 0
        %1565 = vmatpush1.bf16.xpose.msra.mxu0 0
        %1566 = vmatprep.subr.bf16.mxu0 0
        %1567 = vmatpush1.bf16.xpose.msra.mxu0 0
        %1568 = vmatprep.subr.bf16.mxu0 0
        %1569 = vmatpush1.bf16.xpose.msra.mxu0 0
        %1570 = vmatprep.subr.bf16.mxu0 0
        %1571 = vmatpush1.bf16.xpose.msra.mxu0 0
        %1572 = vmatprep.subr.bf16.mxu0 0
        %1573 = vmatpush1.bf16.xpose.msra.mxu0 0
        %1574 = vmatprep.subr.bf16.mxu0 0
        %1575 = vmatpush1.bf16.xpose.msra.mxu0 0
        %1576 = vmatprep.subr.bf16.mxu0 0
        %1577 = vmatpush1.bf16.xpose.msra.mxu0 0
        %1578 = vmatprep.subr.bf16.mxu0 0
        %1579 = vmatpush1.bf16.xpose.msra.mxu0 0
        %1580 = vmatprep.subr.bf16.mxu0 0
        %1581 = vmatpush1.bf16.xpose.msra.mxu0 0
        %1582 = vmatprep.subr.bf16.mxu0 0
        %1583 = vmatpush1.bf16.xpose.msra.mxu0 0
        %1584 = vmatprep.subr.bf16.mxu0 0
        %1585 = vmatpush1.bf16.xpose.msra.mxu0 0
        %1586 = vmatprep.subr.bf16.mxu0 0
        %1587 = vmatpush1.bf16.xpose.msra.mxu0 0
        %1588 = vmatprep.mubr.bf16.mxu0 0
        %1589 = vmatmul.mubr.bf16.gmra.mrb[0].mxu0 %v1551
        %v1590 = vpop.f32.mrb[0].mxu0
        %v1591 = vadd.f32 0.0, %v1590
        %v1592 = vpop.f32.mrb[0].mxu0
        %v1593 = vpop.f32.mrb[0].mxu0
        %v1594 = vpop.f32.mrb[0].mxu0
        %1595 = vdwg.mxu0
        %1596 = vrot.lane.b32.xlu0 %v733, 104
        %v1597 = vpop.permute.xlu0 %1596
        %1598 = vrot.lane.b32.xlu0 %v733, 72
        %v1599 = vpop.permute.xlu0 %1598
        %v1601 = vsel %vm737, %v1597, 0
        %v1604 = vsel %vm737, %v1599, 0
        %1606 = vmatprep.subr.bf16.mxu0 0
        %1607 = vmatpush1.bf16.xpose.msra.mxu0 %v1604
        %1608 = vmatprep.subr.bf16.mxu0 0
        %1609 = vmatpush1.bf16.xpose.msra.mxu0 0
        %1610 = vmatprep.subr.bf16.mxu0 0
        %1611 = vmatpush1.bf16.xpose.msra.mxu0 0
        %1612 = vmatprep.subr.bf16.mxu0 0
        %1613 = vmatpush1.bf16.xpose.msra.mxu0 0
        %1614 = vmatprep.subr.bf16.mxu0 0
        %1615 = vmatpush1.bf16.xpose.msra.mxu0 0
        %1616 = vmatprep.subr.bf16.mxu0 0
        %1617 = vmatpush1.bf16.xpose.msra.mxu0 0
        %1618 = vmatprep.subr.bf16.mxu0 0
        %1619 = vmatpush1.bf16.xpose.msra.mxu0 0
        %1620 = vmatprep.subr.bf16.mxu0 0
        %1621 = vmatpush1.bf16.xpose.msra.mxu0 0
        %1622 = vmatprep.subr.bf16.mxu0 0
        %1623 = vmatpush1.bf16.xpose.msra.mxu0 0
        %1624 = vmatprep.subr.bf16.mxu0 0
        %1625 = vmatpush1.bf16.xpose.msra.mxu0 0
        %1626 = vmatprep.subr.bf16.mxu0 0
        %1627 = vmatpush1.bf16.xpose.msra.mxu0 0
        %1628 = vmatprep.subr.bf16.mxu0 0
        %1629 = vmatpush1.bf16.xpose.msra.mxu0 0
        %1630 = vmatprep.subr.bf16.mxu0 0
        %1631 = vmatpush1.bf16.xpose.msra.mxu0 0
        %1632 = vmatprep.subr.bf16.mxu0 0
        %1633 = vmatpush1.bf16.xpose.msra.mxu0 0
        %1634 = vmatprep.subr.bf16.mxu0 0
        %1635 = vmatpush1.bf16.xpose.msra.mxu0 0
        %1636 = vmatprep.subr.bf16.mxu0 0
        %1637 = vmatpush1.bf16.xpose.msra.mxu0 0
        %1638 = vmatprep.mubr.bf16.mxu0 0
        %1639 = vmatmul.mubr.bf16.gmra.mrb[0].mxu0 %v1601
        %v1640 = vpop.f32.mrb[0].mxu0
        %v1641 = vadd.f32 0.0, %v1640
        %v1642 = vpop.f32.mrb[0].mxu0
        %v1643 = vpop.f32.mrb[0].mxu0
        %v1644 = vpop.f32.mrb[0].mxu0
        %1645 = vdwg.mxu0
        %v1646 = vmul.f32 %v1591, 0.35355338
        %v1647 = vmul.f32 %v1641, 0.35355338
        %v1648 = vsel %vm737, %v1646, -inf
        %1649 = vmax.xlane.f32.xlu0 %v1648
        %v1650 = vpop.xlane.xlu0 %1649
        %v1651 = vsel %vm737, %v1647, -inf
        %1652 = vmax.xlane.f32.xlu0 %v1651
        %v1653 = vpop.xlane.xlu0 %1652
        %v1654 = vsub.f32 %v1646, %v1650
        %v1655 = vsub.f32 %v1647, %v1653
        %v1656 = vmul.f32 %v1654, 1.442695
        %v1657 = vpow.pop %v1656
        %v1658 = vmul.f32 %v1655, 1.442695
        %v1659 = vpow.pop %v1658
        %v1660 = vsel %vm737, %v1657, 0.0
        %1661 = vadd.xlane.f32.xlu0 %v1660
        %v1662 = vpop.xlane.xlu0 %1661
        %v1663 = vsel %vm737, %v1659, 0.0
        %1664 = vadd.xlane.f32.xlu0 %v1663
        %v1665 = vpop.xlane.xlu0 %1664
        %v1666 = vpack.c.bf16 %v1657, %v1657
        %v1667 = vpack.c.bf16 %v1659, %v1659
        %1668 = vrot.lane.b32.xlu0 %v732, 40
        %v1669 = vpop.permute.xlu0 %1668
        %v1671 = vsel %vm737, %v1666, 0
        %v1674 = vsel %vm860, %v1669, 0
        %1676 = vmatprep.subr.bf16.mxu0 0
        %1677 = vmatpush1.bf16.msra.mxu0 %v1674
        %1678 = vmatprep.subr.bf16.mxu0 0
        %1679 = vmatpush1.bf16.msra.mxu0 0
        %1680 = vmatprep.subr.bf16.mxu0 0
        %1681 = vmatpush1.bf16.msra.mxu0 0
        %1682 = vmatprep.subr.bf16.mxu0 0
        %1683 = vmatpush1.bf16.msra.mxu0 0
        %1684 = vmatprep.subr.bf16.mxu0 0
        %1685 = vmatpush1.bf16.msra.mxu0 0
        %1686 = vmatprep.subr.bf16.mxu0 0
        %1687 = vmatpush1.bf16.msra.mxu0 0
        %1688 = vmatprep.subr.bf16.mxu0 0
        %1689 = vmatpush1.bf16.msra.mxu0 0
        %1690 = vmatprep.subr.bf16.mxu0 0
        %1691 = vmatpush1.bf16.msra.mxu0 0
        %1692 = vmatprep.subr.bf16.mxu0 0
        %1693 = vmatpush1.bf16.msra.mxu0 0
        %1694 = vmatprep.subr.bf16.mxu0 0
        %1695 = vmatpush1.bf16.msra.mxu0 0
        %1696 = vmatprep.subr.bf16.mxu0 0
        %1697 = vmatpush1.bf16.msra.mxu0 0
        %1698 = vmatprep.subr.bf16.mxu0 0
        %1699 = vmatpush1.bf16.msra.mxu0 0
        %1700 = vmatprep.subr.bf16.mxu0 0
        %1701 = vmatpush1.bf16.msra.mxu0 0
        %1702 = vmatprep.subr.bf16.mxu0 0
        %1703 = vmatpush1.bf16.msra.mxu0 0
        %1704 = vmatprep.subr.bf16.mxu0 0
        %1705 = vmatpush1.bf16.msra.mxu0 0
        %1706 = vmatprep.subr.bf16.mxu0 0
        %1707 = vmatpush1.bf16.msra.mxu0 0
        %1708 = vmatprep.mubr.bf16.mxu0 0
        %1709 = vmatmul.mubr.bf16.gmra.mrb[0].mxu0 %v1671
        %v1710 = vpop.f32.mrb[0].mxu0
        %v1711 = vadd.f32 0.0, %v1710
        %v1712 = vpop.f32.mrb[0].mxu0
        %v1713 = vpop.f32.mrb[0].mxu0
        %v1714 = vpop.f32.mrb[0].mxu0
        %1715 = vdwg.mxu0
        %1716 = vrot.lane.b32.xlu0 %v733, 40
        %v1717 = vpop.permute.xlu0 %1716
        %v1719 = vsel %vm737, %v1667, 0
        %v1722 = vsel %vm860, %v1717, 0
        %1724 = vmatprep.subr.bf16.mxu0 0
        %1725 = vmatpush1.bf16.msra.mxu0 %v1722
        %1726 = vmatprep.subr.bf16.mxu0 0
        %1727 = vmatpush1.bf16.msra.mxu0 0
        %1728 = vmatprep.subr.bf16.mxu0 0
        %1729 = vmatpush1.bf16.msra.mxu0 0
        %1730 = vmatprep.subr.bf16.mxu0 0
        %1731 = vmatpush1.bf16.msra.mxu0 0
        %1732 = vmatprep.subr.bf16.mxu0 0
        %1733 = vmatpush1.bf16.msra.mxu0 0
        %1734 = vmatprep.subr.bf16.mxu0 0
        %1735 = vmatpush1.bf16.msra.mxu0 0
        %1736 = vmatprep.subr.bf16.mxu0 0
        %1737 = vmatpush1.bf16.msra.mxu0 0
        %1738 = vmatprep.subr.bf16.mxu0 0
        %1739 = vmatpush1.bf16.msra.mxu0 0
        %1740 = vmatprep.subr.bf16.mxu0 0
        %1741 = vmatpush1.bf16.msra.mxu0 0
        %1742 = vmatprep.subr.bf16.mxu0 0
        %1743 = vmatpush1.bf16.msra.mxu0 0
        %1744 = vmatprep.subr.bf16.mxu0 0
        %1745 = vmatpush1.bf16.msra.mxu0 0
        %1746 = vmatprep.subr.bf16.mxu0 0
        %1747 = vmatpush1.bf16.msra.mxu0 0
        %1748 = vmatprep.subr.bf16.mxu0 0
        %1749 = vmatpush1.bf16.msra.mxu0 0
        %1750 = vmatprep.subr.bf16.mxu0 0
        %1751 = vmatpush1.bf16.msra.mxu0 0
        %1752 = vmatprep.subr.bf16.mxu0 0
        %1753 = vmatpush1.bf16.msra.mxu0 0
        %1754 = vmatprep.subr.bf16.mxu0 0
        %1755 = vmatpush1.bf16.msra.mxu0 0
        %1756 = vmatprep.mubr.bf16.mxu0 0
        %1757 = vmatmul.mubr.bf16.gmra.mrb[0].mxu0 %v1719
        %v1758 = vpop.f32.mrb[0].mxu0
        %v1759 = vadd.f32 0.0, %v1758
        %v1760 = vpop.f32.mrb[0].mxu0
        %v1761 = vpop.f32.mrb[0].mxu0
        %v1762 = vpop.f32.mrb[0].mxu0
        %1763 = vdwg.mxu0
        %v1764 = vrcp.pop %v1662
        %v1765 = vrcp.pop %v1665
        %v1766 = vmul.f32 %v1711, %v1764
        %v1767 = vmul.f32 %v1759, %v1765
        %v1768 = vpack.c.bf16 %v1767, %v1766
        %v1770 = vsel %vm737, %v1768, 0
        %v1773 = vsel %vm860, %v731, 0
        %1775 = vmatprep.subr.bf16.mxu0 0
        %1776 = vmatpush1.bf16.msra.mxu0 %v1773
        %1777 = vmatprep.subr.bf16.mxu0 0
        %1778 = vmatpush1.bf16.msra.mxu0 0
        %1779 = vmatprep.subr.bf16.mxu0 0
        %1780 = vmatpush1.bf16.msra.mxu0 0
        %1781 = vmatprep.subr.bf16.mxu0 0
        %1782 = vmatpush1.bf16.msra.mxu0 0
        %1783 = vmatprep.subr.bf16.mxu0 0
        %1784 = vmatpush1.bf16.msra.mxu0 0
        %1785 = vmatprep.subr.bf16.mxu0 0
        %1786 = vmatpush1.bf16.msra.mxu0 0
        %1787 = vmatprep.subr.bf16.mxu0 0
        %1788 = vmatpush1.bf16.msra.mxu0 0
        %1789 = vmatprep.subr.bf16.mxu0 0
        %1790 = vmatpush1.bf16.msra.mxu0 0
        %1791 = vmatprep.subr.bf16.mxu0 0
        %1792 = vmatpush1.bf16.msra.mxu0 0
        %1793 = vmatprep.subr.bf16.mxu0 0
        %1794 = vmatpush1.bf16.msra.mxu0 0
        %1795 = vmatprep.subr.bf16.mxu0 0
        %1796 = vmatpush1.bf16.msra.mxu0 0
        %1797 = vmatprep.subr.bf16.mxu0 0
        %1798 = vmatpush1.bf16.msra.mxu0 0
        %1799 = vmatprep.subr.bf16.mxu0 0
        %1800 = vmatpush1.bf16.msra.mxu0 0
        %1801 = vmatprep.subr.bf16.mxu0 0
        %1802 = vmatpush1.bf16.msra.mxu0 0
        %1803 = vmatprep.subr.bf16.mxu0 0
        %1804 = vmatpush1.bf16.msra.mxu0 0
        %1805 = vmatprep.subr.bf16.mxu0 0
        %1806 = vmatpush1.bf16.msra.mxu0 0
        %1807 = vmatprep.mubr.bf16.mxu0 0
        %1808 = vmatmul.mubr.bf16.gmra.mrb[0].mxu0 %v1770
        %v1809 = vpop.f32.mrb[0].mxu0
        %v1810 = vadd.f32 0.0, %v1809
        %v1811 = vpop.f32.mrb[0].mxu0
        %v1812 = vpop.f32.mrb[0].mxu0
        %v1813 = vadd.f32 0.0, %v1812
        %v1814 = vpop.f32.mrb[0].mxu0
        %1815 = vdwg.mxu0
        %v1816 = vadd.f32 %v1544, %v1810
        %v1817 = vadd.f32 %v1545, %v1813
        %v1818 = vld [vmem:[%s570] sm:$0x1]
        %v1820 = vlaneseq
        %v1821 = vshrl.u32 %v1820, 7
        %v1822 = vsub.s32 0, %v1821
        %v1823 = vrot.slane %v1818, %v1822
        %v1825 = vadd.f32 %v1816, %v1823
        %v1826 = vadd.f32 %v1817, %v1823
        %v1827 = vadd.f32 %v608, %v1825
        %v1828 = vadd.f32 %v609, %v1826
        %v1829 = vld [vmem:[%s573] sm:$0x1]
        %v1830 = vld [vmem:[%s576] sm:$0x1]
        %v1831 = vmul.f32 %v1827, %v614
        %v1832 = vmul.f32 %v1828, %v614
        %1833 = vadd.xlane.f32.xlu0 %v1831
        %v1834 = vpop.xlane.xlu0 %1833
        %1835 = vadd.xlane.f32.xlu0 %v1832
        %v1836 = vpop.xlane.xlu0 %1835
        %v1837 = vmul.f32 %v1834, 0.03125
        %v1838 = vmul.f32 %v1836, 0.03125
        %v1839 = vsub.f32 %v1831, %v1837
        %v1840 = vsub.f32 %v1832, %v1838
        %v1841 = vmul.f32 %v1839, %v614
        %v1842 = vmul.f32 %v1840, %v614
        %v1843 = vmul.f32 %v1841, %v1841
        %v1844 = vmul.f32 %v1842, %v1842
        %1845 = vadd.xlane.f32.xlu0 %v1843
        %v1846 = vpop.xlane.xlu0 %1845
        %1847 = vadd.xlane.f32.xlu0 %v1844
        %v1848 = vpop.xlane.xlu0 %1847
        %v1849 = vmul.f32 %v1846, 0.03125
        %v1850 = vmul.f32 %v1848, 0.03125
        %v1851 = vadd.f32 %v1849, 1e-05
        %v1852 = vadd.f32 %v1850, 1e-05
        %v1853 = vrsqrt.pop %v1851
        %v1854 = vrsqrt.pop %v1852
        %v1855 = vmul.f32 %v1841, %v1853
        %v1856 = vmul.f32 %v1842, %v1854
        %v1858 = vlaneseq
        %v1859 = vshrl.u32 %v1858, 7
        %v1860 = vsub.s32 0, %v1859
        %v1861 = vrot.slane %v1829, %v1860
        %v1863 = vmul.f32 %v1855, %v1861
        %v1864 = vmul.f32 %v1856, %v1861
        %v1866 = vlaneseq
        %v1867 = vshrl.u32 %v1866, 7
        %v1868 = vsub.s32 0, %v1867
        %v1869 = vrot.slane %v1830, %v1868
        %v1871 = vadd.f32 %v1863, %v1869
        %v1872 = vadd.f32 %v1864, %v1869
        %v1873 = vpack.c.bf16 %v1872, %v1871
        %v1874 = vld [vmem:[%s581] sm:$0xf]
        %v1875 = vld [vmem:[%s581 + $0x4] sm:$0xf]
        %v1876 = vld [vmem:[%s581 + $0x8] sm:$0xf]
        %v1877 = vld [vmem:[%s581 + $0xc] sm:$0xf]
        %v1878 = vld [vmem:[%s581 + $0x10] sm:$0xf]
        %v1879 = vld [vmem:[%s581 + $0x14] sm:$0xf]
        %v1880 = vld [vmem:[%s581 + $0x18] sm:$0xf]
        %v1881 = vld [vmem:[%s581 + $0x1c] sm:$0xf]
        %v1882 = vld [vmem:[%s581 + $0x20] sm:$0xf]
        %v1883 = vld [vmem:[%s581 + $0x24] sm:$0xf]
        %v1884 = vld [vmem:[%s581 + $0x28] sm:$0xf]
        %v1885 = vld [vmem:[%s581 + $0x2c] sm:$0xf]
        %v1886 = vld [vmem:[%s581 + $0x30] sm:$0xf]
        %v1887 = vld [vmem:[%s581 + $0x34] sm:$0xf]
        %v1888 = vld [vmem:[%s581 + $0x38] sm:$0xf]
        %v1889 = vld [vmem:[%s581 + $0x3c] sm:$0xf]
        %v1890 = vld [vmem:[%s584] sm:$0x1]
        %v1892 = vlaneseq
        %v1893 = vshrl.u32 %v1892, 7
        %v1894 = vsub.s32 0, %v1893
        %v1895 = vrot.slane %v1890, %v1894
        %v1913 = vunpack.c.l.b16 %v1874
        %v1914 = vunpack.c.l.b16 %v1875
        %v1915 = vunpack.c.l.b16 %v1876
        %v1916 = vunpack.c.l.b16 %v1877
        %v1917 = vunpack.c.l.b16 %v1878
        %v1918 = vunpack.c.l.b16 %v1879
        %v1919 = vunpack.c.l.b16 %v1880
        %v1920 = vunpack.c.l.b16 %v1881
        %v1921 = vunpack.c.l.b16 %v1882
        %v1922 = vunpack.c.l.b16 %v1883
        %v1923 = vunpack.c.l.b16 %v1884
        %v1924 = vunpack.c.l.b16 %v1885
        %v1925 = vunpack.c.l.b16 %v1886
        %v1926 = vunpack.c.l.b16 %v1887
        %v1927 = vunpack.c.l.b16 %v1888
        %v1928 = vunpack.c.l.b16 %v1889
        %v1929 = vpack.c.b16 %v1914, %v1913
        %v1930 = vpack.c.b16 %v1916, %v1915
        %v1931 = vpack.c.b16 %v1918, %v1917
        %v1932 = vpack.c.b16 %v1920, %v1919
        %v1933 = vpack.c.b16 %v1922, %v1921
        %v1934 = vpack.c.b16 %v1924, %v1923
        %v1935 = vpack.c.b16 %v1926, %v1925
        %v1936 = vpack.c.b16 %v1928, %v1927
        %1945 = vmatprep.subr.bf16.mxu0 0
        %1946 = vmatpush1.bf16.msra.mxu0 %v1929
        %1947 = vmatprep.subr.bf16.mxu0 0
        %1948 = vmatpush1.bf16.msra.mxu0 %v1930
        %1949 = vmatprep.subr.bf16.mxu0 0
        %1950 = vmatpush1.bf16.msra.mxu0 %v1931
        %1951 = vmatprep.subr.bf16.mxu0 0
        %1952 = vmatpush1.bf16.msra.mxu0 %v1932
        %1953 = vmatprep.subr.bf16.mxu0 0
        %1954 = vmatpush1.bf16.msra.mxu0 %v1933
        %1955 = vmatprep.subr.bf16.mxu0 0
        %1956 = vmatpush1.bf16.msra.mxu0 %v1934
        %1957 = vmatprep.subr.bf16.mxu0 0
        %1958 = vmatpush1.bf16.msra.mxu0 %v1935
        %1959 = vmatprep.subr.bf16.mxu0 0
        %1960 = vmatpush1.bf16.msra.mxu0 %v1936
        %1961 = vmatprep.subr.bf16.mxu0 0
        %1962 = vmatpush1.bf16.msra.mxu0 0
        %1963 = vmatprep.subr.bf16.mxu0 0
        %1964 = vmatpush1.bf16.msra.mxu0 0
        %1965 = vmatprep.subr.bf16.mxu0 0
        %1966 = vmatpush1.bf16.msra.mxu0 0
        %1967 = vmatprep.subr.bf16.mxu0 0
        %1968 = vmatpush1.bf16.msra.mxu0 0
        %1969 = vmatprep.subr.bf16.mxu0 0
        %1970 = vmatpush1.bf16.msra.mxu0 0
        %1971 = vmatprep.subr.bf16.mxu0 0
        %1972 = vmatpush1.bf16.msra.mxu0 0
        %1973 = vmatprep.subr.bf16.mxu0 0
        %1974 = vmatpush1.bf16.msra.mxu0 0
        %1975 = vmatprep.subr.bf16.mxu0 0
        %1976 = vmatpush1.bf16.msra.mxu0 0
        %1977 = vmatprep.mubr.bf16.mxu0 0
        %1978 = vmatmul.mubr.bf16.gmra.mrb[0].mxu0 %v1873
        %v1979 = vpop.f32.mrb[0].mxu0
        %v1980 = vadd.f32 %v1895, %v1979
        %v1981 = vpop.f32.mrb[0].mxu0
        %v1982 = vpop.f32.mrb[0].mxu0
        %v1983 = vadd.f32 %v1895, %v1982
        %v1984 = vpop.f32.mrb[0].mxu0
        %1985 = vdwg.mxu0
        %v1986 = vmax.f32 %v1980, 0.0
        %v1987 = vmax.f32 %v1983, 0.0
        %v1988 = vpack.c.bf16 %v1987, %v1986
        %v1989 = vld [vmem:[%s589] sm:$0xf]
        %v1990 = vld [vmem:[%s589 + $0x4] sm:$0xf]
        %v1991 = vld [vmem:[%s589 + $0x8] sm:$0xf]
        %v1992 = vld [vmem:[%s589 + $0xc] sm:$0xf]
        %v1993 = vld [vmem:[%s589 + $0x10] sm:$0xf]
        %v1994 = vld [vmem:[%s589 + $0x14] sm:$0xf]
        %v1995 = vld [vmem:[%s589 + $0x18] sm:$0xf]
        %v1996 = vld [vmem:[%s589 + $0x1c] sm:$0xf]
        %v1997 = vld [vmem:[%s589 + $0x20] sm:$0xf]
        %v1998 = vld [vmem:[%s589 + $0x24] sm:$0xf]
        %v1999 = vld [vmem:[%s589 + $0x28] sm:$0xf]
        %v2000 = vld [vmem:[%s589 + $0x2c] sm:$0xf]
        %v2001 = vld [vmem:[%s589 + $0x30] sm:$0xf]
        %v2002 = vld [vmem:[%s589 + $0x34] sm:$0xf]
        %v2003 = vld [vmem:[%s589 + $0x38] sm:$0xf]
        %v2004 = vld [vmem:[%s589 + $0x3c] sm:$0xf]
        %v2005 = vld [vmem:[%s592] sm:$0x1]
        %v2007 = vlaneseq
        %v2008 = vshrl.u32 %v2007, 7
        %v2009 = vsub.s32 0, %v2008
        %v2010 = vrot.slane %v2005, %v2009
        %v2028 = vunpack.c.l.b16 %v1989
        %v2029 = vunpack.c.l.b16 %v1990
        %v2030 = vunpack.c.l.b16 %v1991
        %v2031 = vunpack.c.l.b16 %v1992
        %v2032 = vunpack.c.l.b16 %v1993
        %v2033 = vunpack.c.l.b16 %v1994
        %v2034 = vunpack.c.l.b16 %v1995
        %v2035 = vunpack.c.l.b16 %v1996
        %v2036 = vunpack.c.l.b16 %v1997
        %v2037 = vunpack.c.l.b16 %v1998
        %v2038 = vunpack.c.l.b16 %v1999
        %v2039 = vunpack.c.l.b16 %v2000
        %v2040 = vunpack.c.l.b16 %v2001
        %v2041 = vunpack.c.l.b16 %v2002
        %v2042 = vunpack.c.l.b16 %v2003
        %v2043 = vunpack.c.l.b16 %v2004
        %v2044 = vpack.c.b16 %v2029, %v2028
        %v2045 = vpack.c.b16 %v2031, %v2030
        %v2046 = vpack.c.b16 %v2033, %v2032
        %v2047 = vpack.c.b16 %v2035, %v2034
        %v2048 = vpack.c.b16 %v2037, %v2036
        %v2049 = vpack.c.b16 %v2039, %v2038
        %v2050 = vpack.c.b16 %v2041, %v2040
        %v2051 = vpack.c.b16 %v2043, %v2042
        %2060 = vmatprep.subr.bf16.mxu0 0
        %2061 = vmatpush1.bf16.msra.mxu0 %v2044
        %2062 = vmatprep.subr.bf16.mxu0 0
        %2063 = vmatpush1.bf16.msra.mxu0 %v2045
        %2064 = vmatprep.subr.bf16.mxu0 0
        %2065 = vmatpush1.bf16.msra.mxu0 %v2046
        %2066 = vmatprep.subr.bf16.mxu0 0
        %2067 = vmatpush1.bf16.msra.mxu0 %v2047
        %2068 = vmatprep.subr.bf16.mxu0 0
        %2069 = vmatpush1.bf16.msra.mxu0 %v2048
        %2070 = vmatprep.subr.bf16.mxu0 0
        %2071 = vmatpush1.bf16.msra.mxu0 %v2049
        %2072 = vmatprep.subr.bf16.mxu0 0
        %2073 = vmatpush1.bf16.msra.mxu0 %v2050
        %2074 = vmatprep.subr.bf16.mxu0 0
        %2075 = vmatpush1.bf16.msra.mxu0 %v2051
        %2076 = vmatprep.subr.bf16.mxu0 0
        %2077 = vmatpush1.bf16.msra.mxu0 0
        %2078 = vmatprep.subr.bf16.mxu0 0
        %2079 = vmatpush1.bf16.msra.mxu0 0
        %2080 = vmatprep.subr.bf16.mxu0 0
        %2081 = vmatpush1.bf16.msra.mxu0 0
        %2082 = vmatprep.subr.bf16.mxu0 0
        %2083 = vmatpush1.bf16.msra.mxu0 0
        %2084 = vmatprep.subr.bf16.mxu0 0
        %2085 = vmatpush1.bf16.msra.mxu0 0
        %2086 = vmatprep.subr.bf16.mxu0 0
        %2087 = vmatpush1.bf16.msra.mxu0 0
        %2088 = vmatprep.subr.bf16.mxu0 0
        %2089 = vmatpush1.bf16.msra.mxu0 0
        %2090 = vmatprep.subr.bf16.mxu0 0
        %2091 = vmatpush1.bf16.msra.mxu0 0
        %2092 = vmatprep.mubr.bf16.mxu0 0
        %2093 = vmatmul.mubr.bf16.gmra.mrb[0].mxu0 %v1988
        %v2094 = vpop.f32.mrb[0].mxu0
        %v2095 = vadd.f32 %v2010, %v2094
        %v2096 = vpop.f32.mrb[0].mxu0
        %v2097 = vpop.f32.mrb[0].mxu0
        %v2098 = vadd.f32 %v2010, %v2097
        %v2099 = vpop.f32.mrb[0].mxu0
        %2100 = vdwg.mxu0
        %v2101 = vadd.f32 %v1871, %v2095
        %v2102 = vadd.f32 %v1872, %v2098
        %v2103 = vld [vmem:[%s595] sm:$0x1]
        %v2104 = vld [vmem:[%s598] sm:$0x1]
        %v2105 = vmul.f32 %v2101, %v614
        %v2106 = vmul.f32 %v2102, %v614
        %2107 = vadd.xlane.f32.xlu0 %v2105
        %v2108 = vpop.xlane.xlu0 %2107
        %2109 = vadd.xlane.f32.xlu0 %v2106
        %v2110 = vpop.xlane.xlu0 %2109
        %v2111 = vmul.f32 %v2108, 0.03125
        %v2112 = vmul.f32 %v2110, 0.03125
        %v2113 = vsub.f32 %v2105, %v2111
        %v2114 = vsub.f32 %v2106, %v2112
        %v2115 = vmul.f32 %v2113, %v614
        %v2116 = vmul.f32 %v2114, %v614
        %v2117 = vmul.f32 %v2115, %v2115
        %v2118 = vmul.f32 %v2116, %v2116
        %2119 = vadd.xlane.f32.xlu0 %v2117
        %v2120 = vpop.xlane.xlu0 %2119
        %2121 = vadd.xlane.f32.xlu0 %v2118
        %v2122 = vpop.xlane.xlu0 %2121
        %v2123 = vmul.f32 %v2120, 0.03125
        %v2124 = vmul.f32 %v2122, 0.03125
        %v2125 = vadd.f32 %v2123, 1e-05
        %v2126 = vadd.f32 %v2124, 1e-05
        %v2127 = vrsqrt.pop %v2125
        %v2128 = vrsqrt.pop %v2126
        %v2129 = vmul.f32 %v2115, %v2127
        %v2130 = vmul.f32 %v2116, %v2128
        %v2132 = vlaneseq
        %v2133 = vshrl.u32 %v2132, 7
        %v2134 = vsub.s32 0, %v2133
        %v2135 = vrot.slane %v2103, %v2134
        %v2137 = vmul.f32 %v2129, %v2135
        %v2138 = vmul.f32 %v2130, %v2135
        %v2140 = vlaneseq
        %v2141 = vshrl.u32 %v2140, 7
        %v2142 = vsub.s32 0, %v2141
        %v2143 = vrot.slane %v2104, %v2142
        %v2145 = vadd.f32 %v2137, %v2143
        %v2146 = vadd.f32 %v2138, %v2143
        %2147 = vst [vmem:[#allocation2] sm:$0xff] %v2145
        %2148 = vst [vmem:[#allocation2 + $0x8] sm:$0xff] %v2146
        %2149 = vst [vmem:[#allocation3] sm:$0xff] %v2145
        %2150 = vst [vmem:[#allocation3 + $0x8] sm:$0xff] %v2146
        // Predicated region
        $region77: #{transformer_encoder.1} parent=71 // pred_check
          %p2151 = pneg %p371
        $region78: #{transformer_encoder.1} parent=71 // pred_check_branch
          %2153 = sbr.rel (%p2151) target = $region80
        $region79: #{transformer_encoder.1} parent=71 // pred_region
          %s2155 = ssub.s32 256, 256
          %2156 = vsyncadd [#allocation4], %s2155
          %s2157 = sshll.u32 [#allocation3], 4
          %s2158 = int_to_ptr.vmem [resolvable:$true] %s2157
          %2163 = dma.vmem_to_hbm [thread:$0]  %s2158, 256, %s13, [#allocation4], 128, 128, 8
        $region80: #{transformer_encoder.1} parent=71 // pred_fallthru
          _
        // Predicated region
        $region81: #{transformer_encoder.1} parent=71 // pred_check
          %p2164 = pneg %p371
        $region82: #{transformer_encoder.1} parent=71 // pred_check_branch
          %2166 = sbr.rel (%p2164) target = $region84
        $region83: #{transformer_encoder.1} parent=71 // pred_region
          %2167 = dma.done [#allocation4], 256
        $region84: #{transformer_encoder.1} parent=71 // pred_fallthru
          _
      $region72: #{transformer_encoder.1} parent=5 // pred_fallthru
        _
      %p2168 = scmp.le.s32.totalorder 2, %s20
      // Predicated region
      $region85: #{transformer_encoder.1} parent=5 // pred_check
        %p2169 = pneg %p2168
      $region86: #{transformer_encoder.1} parent=5 // pred_check_branch
        %2171 = sbr.rel (%p2169) target = $region88
      $region87: #{transformer_encoder.1} parent=5 // pred_region
        %s2172 = ssub.s32 %s20, 2
      $region88: #{transformer_encoder.1} parent=5 // pred_fallthru
        _
    $region6: #{transformer_encoder.1} parent=1 // loop_footer
      %s24 = sadd.s32 1, %s20
    $region7: #{transformer_encoder.1} parent=1 // loop_footer_branch
      %19 = sbr.rel target = $region3
    $region8: #{transformer_encoder.1} parent=1 // loop_exit
      _
    %2173 = vsyncpa [#allocation4], 1
    %s2174 = scalar_lea.sflag [#allocation4], 1
    %2175 = vsyncpa %s2174, 1

</llo_original>
